<compile_context>
chip_gen: v6e
topology: v6e:2x2x1
jax: 0.10.0
libtpu: 0.0.40
codegen_flags: <defaults>
</compile_context>

<pallas_src>
import numpy as np
import jax
import jax.numpy as jnp
from jax import lax
from jax.experimental import pallas as pl
from jax.experimental.pallas import tpu as pltpu

# ------------------- physical constants (torch __init__ defaults) -------------------
MASS = 2.0
GZ = -9.81
MOTOR_DIST = 0.28
KF = 0.0244101                        # same value hard-coded in torch forces()
BF = -30.48576
KM = 0.00029958
ACT_SCALE = 100.0
DT = 0.05
NX = 12
NU = 4

J_MAT_NP = np.array([[0.01566089, 3.18037e-06, 0.0],
                     [3.18037e-06, 0.01562078, 0.0],
                     [0.0, 0.0, 0.02226868]], dtype=np.float64)
# torch stores J as float32 and inverts it in float32; mirror that.
J_INV_NP = np.linalg.inv(J_MAT_NP.astype(np.float32)).astype(np.float64)

_SS_NP = np.array([[1.0, 1.0, 0.0],
                   [1.0, -1.0, 0.0],
                   [-1.0, -1.0, 0.0],
                   [-1.0, 1.0, 0.0]], dtype=np.float64)
_SS_NP = _SS_NP / np.linalg.norm(_SS_NP, axis=-1, keepdims=True)

# Trace-time folded constants (plain Python floats).
KF_ACC = KF * ACT_SCALE / MASS                              # thrust accel / raw control
BF4_ACC = 4.0 * BF / MASS                                   # constant z accel offset
GZ2 = 2.0 * GZ
LKF_S = MOTOR_DIST * KF * float(_SS_NP[0, 0]) * ACT_SCALE   # |arm_xy| * kf * act_scale
KM_S = KM * ACT_SCALE
MG_Z = MASS * GZ


# ------------------- struct-of-arrays math (traced inside the Pallas kernel) --------
# Every argument is a dense 2-D f32 array of shape (CHUNK, 128); every constant is a
# Python float literal.

def _cross_soa(a0, a1, a2, b0, b1, b2):
    return (a1 * b2 - a2 * b1,
            a2 * b0 - a0 * b2,
            a0 * b1 - a1 * b0)


def _matvec3_soa(M, v0, v1, v2):
    """M is a 3x3 numpy constant; skips exactly-zero entries at trace time."""
    vs = (v0, v1, v2)
    out = []
    for i in range(3):
        terms = [float(M[i, j]) * vs[j] for j in range(3) if float(M[i, j]) != 0.0]
        acc = terms[0]
        for t in terms[1:]:
            acc = acc + t
        out.append(acc)
    return tuple(out)


def _dynamics_soa(state, fz_acc, tau0, tau1, tau2):
    """Continuous dynamics; control-only terms (fz_acc, tau*) are precomputed."""
    (p0, p1, p2, m0, m1, m2, v0, v1, v2, w0, w1, w2) = state

    # --- MRP -> quaternion (scalar qs, vector qv) for +m ---
    n2 = m0 * m0 + m1 * m1 + m2 * m2
    inv = pl.reciprocal(1.0 + n2, approx=True)      # EUP slot, not VALU divide
    omn = 1.0 - n2
    qs = omn * inv
    qv0 = 2.0 * m0 * inv
    qv1 = 2.0 * m1 * inv
    qv2 = 2.0 * m2 * inv

    # --- pdot = quatrot(q(+m), v) = v + 2 qv x (qs*v + qv x v) ---
    t0, t1, t2 = _cross_soa(qv0, qv1, qv2, v0, v1, v2)
    t0 = qs * v0 + t0
    t1 = qs * v1 + t1
    t2 = qs * v2 + t2
    c0, c1, c2 = _cross_soa(qv0, qv1, qv2, t0, t1, t2)
    pdot0 = v0 + 2.0 * c0
    pdot1 = v1 + 2.0 * c1
    pdot2 = v2 + 2.0 * c2

    # --- mdot = 1/4 * ((1 - n2) w + 2 m x w + 2 (m.w) m) ---
    mw = m0 * w0 + m1 * w1 + m2 * w2
    x0, x1, x2 = _cross_soa(m0, m1, m2, w0, w1, w2)
    mdot0 = 0.25 * (omn * w0 + 2.0 * x0 + 2.0 * mw * m0)
    mdot1 = 0.25 * (omn * w1 + 2.0 * x1 + 2.0 * mw * m1)
    mdot2 = 0.25 * (omn * w2 + 2.0 * x2 + 2.0 * mw * m2)

    # --- gravity accel: quatrot(q(-m), [0,0,g_z]) written sign-folded in qv ---
    gx = GZ2 * (qv0 * qv2 - qv1 * qs)
    gy = GZ2 * (qv1 * qv2 + qv0 * qs)
    gz = GZ * (1.0 - 2.0 * (qv0 * qv0 + qv1 * qv1))
    # (drag term dropped: cd == [0,0,0] so it is identically zero)

    # --- vdot = F/m - w x v (thrust + Bf already folded into fz_acc) ---
    wv0, wv1, wv2 = _cross_soa(w0, w1, w2, v0, v1, v2)
    vdot0 = gx - wv0
    vdot1 = gy - wv1
    vdot2 = fz_acc + gz - wv2

    # --- wdot = Jinv (tau - w x (J w)) ---
    Jw0, Jw1, Jw2 = _matvec3_soa(J_MAT_NP, w0, w1, w2)
    cw0, cw1, cw2 = _cross_soa(w0, w1, w2, Jw0, Jw1, Jw2)
    r0 = tau0 - cw0
    r1 = tau1 - cw1
    r2 = tau2 - cw2
    wdot0, wdot1, wdot2 = _matvec3_soa(J_INV_NP, r0, r1, r2)

    return (pdot0, pdot1, pdot2, mdot0, mdot1, mdot2,
            vdot0, vdot1, vdot2, wdot0, wdot1, wdot2)


def _rk4_soa(state, ctrl):
    (u0, u1, u2, u3) = ctrl
    # Control-only terms hoisted out of the 4 stages; ACT_SCALE / mass folded in.
    fz_acc = KF_ACC * (u0 + u1 + u2 + u3) + BF4_ACC
    tau0 = LKF_S * (u0 - u1 - u2 + u3)        # arm torques (bf terms cancel exactly)
    tau1 = LKF_S * (-u0 - u1 + u2 + u3)
    tau2 = KM_S * (u0 - u1 + u2 - u3)

    dt = DT
    dt2 = 0.5 * DT
    k1 = _dynamics_soa(state, fz_acc, tau0, tau1, tau2)
    acc = list(k1)
    k2 = _dynamics_soa(tuple(s + dt2 * k for s, k in zip(state, k1)),
                       fz_acc, tau0, tau1, tau2)
    acc = [a + 2.0 * k for a, k in zip(acc, k2)]
    k3 = _dynamics_soa(tuple(s + dt2 * k for s, k in zip(state, k2)),
                       fz_acc, tau0, tau1, tau2)
    acc = [a + 2.0 * k for a, k in zip(acc, k3)]
    k4 = _dynamics_soa(tuple(s + dt * k for s, k in zip(state, k3)),
                       fz_acc, tau0, tau1, tau2)
    c = dt / 6.0
    return tuple(s + c * (a + k) for s, a, k in zip(state, acc, k4))


# ------------------- Pallas kernel -------------------
CHUNK = 8   # sublane rows per inner iteration: one vreg per state component


def rexquad_rk4_kernel(x_ref, u_ref, o_ref):
    # x_ref: (12, rb, 128), u_ref: (4, rb, 128), o_ref: (12, rb, 128)
    rb = x_ref.shape[1]
    n_chunks = rb // CHUNK

    def chunk_body(c, carry):
        r0 = pl.multiple_of(c * CHUNK, CHUNK)
        state = tuple(x_ref[i, pl.ds(r0, CHUNK), :] for i in range(NX))
        ctrl = tuple(u_ref[i, pl.ds(r0, CHUNK), :] for i in range(NU))
        out = _rk4_soa(state, ctrl)
        for i in range(NX):
            o_ref[i, pl.ds(r0, CHUNK), :] = out[i].astype(o_ref.dtype)
        return carry

    lax.fori_loop(0, n_chunks, chunk_body, 0)


# ------------------- wrapper -------------------
def _ceil_div(a, b):
    return -(-a // b)


def _choose_grid(B):
    """Pick (n_blocks, block_b): block_b multiple of 1024 rows (8 sublanes x 128
    lanes), >= 2 grid steps when the batch allows (v7x megacore), blocks <= 8192
    rows, and padding waste minimized."""
    UNIT = 1024
    units = _ceil_div(B, UNIT)
    if units <= 1:
        return 1, UNIT
    nb_min = max(2, _ceil_div(units, 8))
    best = None
    for nb in range(nb_min, nb_min + 8):
        upb = _ceil_div(units, nb)
        waste = nb * upb - units
        if best is None or waste < best[0]:
            best = (waste, nb, upb)
        if waste == 0:
            break
    _, nb, upb = best
    return nb, upb * UNIT


def rex_quadrotor_forward(x, u):
    """Equivalent of RexQuadrotor.forward(x, u, jacobian=False): one RK4 step.

    x: (B, 12), u: (B, 4) float32.
    """
    # TODO(synk): jacobian=True branch (RexQuadrotor_dynamics_jac autograd Jacobians)
    # is not implemented in-kernel.
    B = x.shape[0]
    assert x.shape == (B, NX) and u.shape == (B, NU)
    dtype = x.dtype

    n_blocks, block_b = _choose_grid(B)
    B_pad = n_blocks * block_b
    R = B_pad // 128
    rb = block_b // 128
    pad = B_pad - B

    # Single pad of the transposed SoA layout (fusable; no zeros+scatter round trip).
    # TODO(synk): making the (12, B) SoA layout the producer/consumer API contract
    # would remove these HBM transposes entirely.
    xt = jnp.pad(x.T, ((0, 0), (0, pad))).reshape(NX, R, 128)
    ut = jnp.pad(u.T, ((0, 0), (0, pad))).reshape(NU, R, 128)

    out = pl.pallas_call(
        rexquad_rk4_kernel,
        out_shape=jax.ShapeDtypeStruct((NX, R, 128), dtype),
        grid=(n_blocks,),
        in_specs=[pl.BlockSpec((NX, rb, 128), lambda i: (0, i, 0)),
                  pl.BlockSpec((NU, rb, 128), lambda i: (0, i, 0))],
        out_specs=pl.BlockSpec((NX, rb, 128), lambda i: (0, i, 0)),
        compiler_params=pltpu.CompilerParams(
            dimension_semantics=("parallel",),
            vmem_limit_bytes=32 * 1024 * 1024),
    )(xt, ut)

    return out.reshape(NX, B_pad)[:, :B].T


# ------------- pure-JAX reference (faithful AoS translation of the torch code) -------------
_J = jnp.asarray(J_MAT_NP, jnp.float32)
_JINV = jnp.asarray(J_INV_NP, jnp.float32)
_G = jnp.asarray([0.0, 0.0, GZ], jnp.float32)
_BF_VEC = jnp.asarray([0.0, 0.0, 4.0 * BF], jnp.float32)
_CD = jnp.zeros((3,), jnp.float32)
_CROSS_A = jnp.asarray([0.25, 0.25, 0.25], jnp.float32)   # [x, y, y] as in the torch source
_SS = jnp.asarray(_SS_NP, jnp.float32)


def _ref_mrp2quat(m):
    n2 = jnp.sum(m * m, axis=-1, keepdims=True)
    return jnp.concatenate([1.0 - n2, 2.0 * m], axis=-1) / (1.0 + n2)


def _ref_quatrot(q, x):
    s, v = q[..., 0:1], q[..., 1:4]
    return x + 2.0 * jnp.cross(v, s * x + jnp.cross(v, x))


def _ref_w2pdot(m, w):
    n2 = jnp.sum(m * m, axis=-1, keepdims=True)
    mw = jnp.sum(m * w, axis=-1, keepdims=True)
    return 0.25 * ((1.0 - n2) * w + 2.0 * jnp.cross(m, w) + 2.0 * mw * m)


def _ref_forces(x, u):
    m = x[..., 3:6]
    q = _ref_mrp2quat(-m)
    F = jnp.sum(0.0244101 * u, axis=-1, keepdims=True)
    F = jnp.concatenate([jnp.zeros_like(F), jnp.zeros_like(F), F], axis=-1)
    df = -jnp.sign(m) * 0.5 * 1.27 * (m * m) * _CD * _CROSS_A
    return F + df + _ref_quatrot(q, MASS * _G) + _BF_VEC


def _ref_moments(x, u):
    M = KM * u
    tau3 = M[..., 0] - M[..., 1] + M[..., 2] - M[..., 3]
    zeros = jnp.zeros_like(tau3)
    torque = jnp.stack([zeros, zeros, tau3], axis=-1)
    bz = KF * u + BF
    fvec = jnp.stack([jnp.zeros_like(bz), jnp.zeros_like(bz), bz], axis=-1)
    torque = torque + jnp.cross((MOTOR_DIST * _SS)[None], fvec).sum(axis=-2)
    return torque


def _ref_dynamics(x, u):
    u = ACT_SCALE * u
    m, v, w = x[..., 3:6], x[..., 6:9], x[..., 9:12]
    q = _ref_mrp2quat(m)
    F = _ref_forces(x, u)
    tau = _ref_moments(x, u)
    mdot = _ref_w2pdot(m, w)
    pdot = _ref_quatrot(q, v)
    vdot = F / MASS - jnp.cross(w, v)
    Jw = jnp.einsum('ij,bj->bi', _J, w)
    wdot = jnp.einsum('ij,bj->bi', _JINV, tau - jnp.cross(w, Jw))
    return jnp.concatenate([pdot, mdot, vdot, wdot], axis=-1)


def _ref_rk4(x, u):
    dt, dt2 = DT, DT / 2.0
    k1 = _ref_dynamics(x, u)
    k2 = _ref_dynamics(x + dt2 * k1, u)
    k3 = _ref_dynamics(x + dt2 * k2, u)
    k4 = _ref_dynamics(x + dt * k3, u)
    return x + (dt / 6.0) * (k1 + 2.0 * k2 + 2.0 * k3 + k4)


if __name__ == "__main__":
    key = jax.random.PRNGKey(0)
    kx, ku = jax.random.split(key)
    B = 2
    # small random state (pos, mrp, vel, omega) and near-hover throttle (~14.5)
    x = 0.3 * jax.random.normal(kx, (B, NX), dtype=jnp.float32)
    u = 14.5 + 0.5 * jax.random.normal(ku, (B, NU), dtype=jnp.float32)

    out = jax.block_until_ready(rex_quadrotor_forward(x, u))
    ref = _ref_rk4(x, u)

    assert out.shape == (B, NX) and out.dtype == jnp.float32
    # slightly looser tolerance because the kernel uses the EUP approx reciprocal
    np.testing.assert_allclose(np.asarray(out), np.asarray(ref), rtol=2e-3, atol=2e-3)
    print("KERNEL_OK")
</pallas_src>

<mosaic_0001>
module attributes {stable_mosaic.version = 11 : i64} {
  func.func @rexquad_rk4_kernel(%arg0: i32, %arg1: memref<12x8x128xf32, #tpu.memory_space<vmem>>, %arg2: memref<4x8x128xf32, #tpu.memory_space<vmem>>, %arg3: memref<12x8x128xf32, #tpu.memory_space<vmem>>) attributes {dimension_semantics = [#tpu.dimension_semantics<parallel>], iteration_bounds = array<i64: 1>, scalar_prefetch = 0 : i64, scratch_operands = 0 : i64, tpu.core_type = #tpu.core_type<tc>, window_params = [{transform_indices = @transform_0, window_bounds = array<i64: 12, 8, 128>}, {transform_indices = @transform_1, window_bounds = array<i64: 4, 8, 128>}, {transform_indices = @transform_2, window_bounds = array<i64: 12, 8, 128>}]} {
    %c0_i32 = arith.constant 0 : i32
    %c8_i32 = arith.constant 8 : i32
    %0 = arith.muli %c0_i32, %c8_i32 : i32
    %1 = tpu.assume_multiple %0, 8 : i32
    %c0 = arith.constant 0 : index
    %2 = arith.index_cast %1 : i32 to index
    %c0_0 = arith.constant 0 : index
    %3 = vector.load %arg1[%c0, %2, %c0_0] : memref<12x8x128xf32, #tpu.memory_space<vmem>>, vector<1x8x128xf32>
    %4 = vector.shape_cast %3 : vector<1x8x128xf32> to vector<8x128xf32>
    %c1 = arith.constant 1 : index
    %5 = arith.index_cast %1 : i32 to index
    %c0_1 = arith.constant 0 : index
    %6 = vector.load %arg1[%c1, %5, %c0_1] : memref<12x8x128xf32, #tpu.memory_space<vmem>>, vector<1x8x128xf32>
    %7 = vector.shape_cast %6 : vector<1x8x128xf32> to vector<8x128xf32>
    %c2 = arith.constant 2 : index
    %8 = arith.index_cast %1 : i32 to index
    %c0_2 = arith.constant 0 : index
    %9 = vector.load %arg1[%c2, %8, %c0_2] : memref<12x8x128xf32, #tpu.memory_space<vmem>>, vector<1x8x128xf32>
    %10 = vector.shape_cast %9 : vector<1x8x128xf32> to vector<8x128xf32>
    %c3 = arith.constant 3 : index
    %11 = arith.index_cast %1 : i32 to index
    %c0_3 = arith.constant 0 : index
    %12 = vector.load %arg1[%c3, %11, %c0_3] : memref<12x8x128xf32, #tpu.memory_space<vmem>>, vector<1x8x128xf32>
    %13 = vector.shape_cast %12 : vector<1x8x128xf32> to vector<8x128xf32>
    %c4 = arith.constant 4 : index
    %14 = arith.index_cast %1 : i32 to index
    %c0_4 = arith.constant 0 : index
    %15 = vector.load %arg1[%c4, %14, %c0_4] : memref<12x8x128xf32, #tpu.memory_space<vmem>>, vector<1x8x128xf32>
    %16 = vector.shape_cast %15 : vector<1x8x128xf32> to vector<8x128xf32>
    %c5 = arith.constant 5 : index
    %17 = arith.index_cast %1 : i32 to index
    %c0_5 = arith.constant 0 : index
    %18 = vector.load %arg1[%c5, %17, %c0_5] : memref<12x8x128xf32, #tpu.memory_space<vmem>>, vector<1x8x128xf32>
    %19 = vector.shape_cast %18 : vector<1x8x128xf32> to vector<8x128xf32>
    %c6 = arith.constant 6 : index
    %20 = arith.index_cast %1 : i32 to index
    %c0_6 = arith.constant 0 : index
    %21 = vector.load %arg1[%c6, %20, %c0_6] : memref<12x8x128xf32, #tpu.memory_space<vmem>>, vector<1x8x128xf32>
    %22 = vector.shape_cast %21 : vector<1x8x128xf32> to vector<8x128xf32>
    %c7 = arith.constant 7 : index
    %23 = arith.index_cast %1 : i32 to index
    %c0_7 = arith.constant 0 : index
    %24 = vector.load %arg1[%c7, %23, %c0_7] : memref<12x8x128xf32, #tpu.memory_space<vmem>>, vector<1x8x128xf32>
    %25 = vector.shape_cast %24 : vector<1x8x128xf32> to vector<8x128xf32>
    %c8 = arith.constant 8 : index
    %26 = arith.index_cast %1 : i32 to index
    %c0_8 = arith.constant 0 : index
    %27 = vector.load %arg1[%c8, %26, %c0_8] : memref<12x8x128xf32, #tpu.memory_space<vmem>>, vector<1x8x128xf32>
    %28 = vector.shape_cast %27 : vector<1x8x128xf32> to vector<8x128xf32>
    %c9 = arith.constant 9 : index
    %29 = arith.index_cast %1 : i32 to index
    %c0_9 = arith.constant 0 : index
    %30 = vector.load %arg1[%c9, %29, %c0_9] : memref<12x8x128xf32, #tpu.memory_space<vmem>>, vector<1x8x128xf32>
    %31 = vector.shape_cast %30 : vector<1x8x128xf32> to vector<8x128xf32>
    %c10 = arith.constant 10 : index
    %32 = arith.index_cast %1 : i32 to index
    %c0_10 = arith.constant 0 : index
    %33 = vector.load %arg1[%c10, %32, %c0_10] : memref<12x8x128xf32, #tpu.memory_space<vmem>>, vector<1x8x128xf32>
    %34 = vector.shape_cast %33 : vector<1x8x128xf32> to vector<8x128xf32>
    %c11 = arith.constant 11 : index
    %35 = arith.index_cast %1 : i32 to index
    %c0_11 = arith.constant 0 : index
    %36 = vector.load %arg1[%c11, %35, %c0_11] : memref<12x8x128xf32, #tpu.memory_space<vmem>>, vector<1x8x128xf32>
    %37 = vector.shape_cast %36 : vector<1x8x128xf32> to vector<8x128xf32>
    %c0_12 = arith.constant 0 : index
    %38 = arith.index_cast %1 : i32 to index
    %c0_13 = arith.constant 0 : index
    %39 = vector.load %arg2[%c0_12, %38, %c0_13] : memref<4x8x128xf32, #tpu.memory_space<vmem>>, vector<1x8x128xf32>
    %40 = vector.shape_cast %39 : vector<1x8x128xf32> to vector<8x128xf32>
    %c1_14 = arith.constant 1 : index
    %41 = arith.index_cast %1 : i32 to index
    %c0_15 = arith.constant 0 : index
    %42 = vector.load %arg2[%c1_14, %41, %c0_15] : memref<4x8x128xf32, #tpu.memory_space<vmem>>, vector<1x8x128xf32>
    %43 = vector.shape_cast %42 : vector<1x8x128xf32> to vector<8x128xf32>
    %c2_16 = arith.constant 2 : index
    %44 = arith.index_cast %1 : i32 to index
    %c0_17 = arith.constant 0 : index
    %45 = vector.load %arg2[%c2_16, %44, %c0_17] : memref<4x8x128xf32, #tpu.memory_space<vmem>>, vector<1x8x128xf32>
    %46 = vector.shape_cast %45 : vector<1x8x128xf32> to vector<8x128xf32>
    %c3_18 = arith.constant 3 : index
    %47 = arith.index_cast %1 : i32 to index
    %c0_19 = arith.constant 0 : index
    %48 = vector.load %arg2[%c3_18, %47, %c0_19] : memref<4x8x128xf32, #tpu.memory_space<vmem>>, vector<1x8x128xf32>
    %49 = vector.shape_cast %48 : vector<1x8x128xf32> to vector<8x128xf32>
    %50 = arith.addf %40, %43 : vector<8x128xf32>
    %51 = arith.addf %50, %46 : vector<8x128xf32>
    %52 = arith.addf %51, %49 : vector<8x128xf32>
    %cst = arith.constant 1.220505 : f32
    %53 = vector.broadcast %cst : f32 to vector<8x128xf32>
    %54 = arith.mulf %53, %52 : vector<8x128xf32>
    %cst_20 = arith.constant -60.9715195 : f32
    %55 = vector.broadcast %cst_20 : f32 to vector<8x128xf32>
    %56 = arith.addf %54, %55 : vector<8x128xf32>
    %57 = arith.subf %40, %43 : vector<8x128xf32>
    %58 = arith.subf %57, %46 : vector<8x128xf32>
    %59 = arith.addf %58, %49 : vector<8x128xf32>
    %cst_21 = arith.constant 0.483295321 : f32
    %60 = vector.broadcast %cst_21 : f32 to vector<8x128xf32>
    %61 = arith.mulf %60, %59 : vector<8x128xf32>
    %cst_22 = arith.constant 0.000000e+00 : f32
    %62 = vector.broadcast %cst_22 : f32 to vector<8x128xf32>
    %63 = arith.subf %62, %40 : vector<8x128xf32>
    %64 = arith.subf %63, %43 : vector<8x128xf32>
    %65 = arith.addf %64, %46 : vector<8x128xf32>
    %66 = arith.addf %65, %49 : vector<8x128xf32>
    %cst_23 = arith.constant 0.483295321 : f32
    %67 = vector.broadcast %cst_23 : f32 to vector<8x128xf32>
    %68 = arith.mulf %67, %66 : vector<8x128xf32>
    %69 = arith.subf %40, %43 : vector<8x128xf32>
    %70 = arith.addf %69, %46 : vector<8x128xf32>
    %71 = arith.subf %70, %49 : vector<8x128xf32>
    %cst_24 = arith.constant 2.995800e-02 : f32
    %72 = vector.broadcast %cst_24 : f32 to vector<8x128xf32>
    %73 = arith.mulf %72, %71 : vector<8x128xf32>
    %74 = arith.mulf %13, %13 : vector<8x128xf32>
    %75 = arith.mulf %16, %16 : vector<8x128xf32>
    %76 = arith.addf %74, %75 : vector<8x128xf32>
    %77 = arith.mulf %19, %19 : vector<8x128xf32>
    %78 = arith.addf %76, %77 : vector<8x128xf32>
    %cst_25 = arith.constant 1.000000e+00 : f32
    %79 = vector.broadcast %cst_25 : f32 to vector<8x128xf32>
    %80 = arith.addf %79, %78 : vector<8x128xf32>
    %81 = tpu.reciprocal %80 {approx = true} : vector<8x128xf32> -> vector<8x128xf32>
    %cst_26 = arith.constant 1.000000e+00 : f32
    %82 = vector.broadcast %cst_26 : f32 to vector<8x128xf32>
    %83 = arith.subf %82, %78 : vector<8x128xf32>
    %84 = arith.mulf %83, %81 : vector<8x128xf32>
    %cst_27 = arith.constant 2.000000e+00 : f32
    %85 = vector.broadcast %cst_27 : f32 to vector<8x128xf32>
    %86 = arith.mulf %85, %13 : vector<8x128xf32>
    %87 = arith.mulf %86, %81 : vector<8x128xf32>
    %cst_28 = arith.constant 2.000000e+00 : f32
    %88 = vector.broadcast %cst_28 : f32 to vector<8x128xf32>
    %89 = arith.mulf %88, %16 : vector<8x128xf32>
    %90 = arith.mulf %89, %81 : vector<8x128xf32>
    %cst_29 = arith.constant 2.000000e+00 : f32
    %91 = vector.broadcast %cst_29 : f32 to vector<8x128xf32>
    %92 = arith.mulf %91, %19 : vector<8x128xf32>
    %93 = arith.mulf %92, %81 : vector<8x128xf32>
    %94 = arith.mulf %90, %28 : vector<8x128xf32>
    %95 = arith.mulf %93, %25 : vector<8x128xf32>
    %96 = arith.subf %94, %95 : vector<8x128xf32>
    %97 = arith.mulf %93, %22 : vector<8x128xf32>
    %98 = arith.mulf %87, %28 : vector<8x128xf32>
    %99 = arith.subf %97, %98 : vector<8x128xf32>
    %100 = arith.mulf %87, %25 : vector<8x128xf32>
    %101 = arith.mulf %90, %22 : vector<8x128xf32>
    %102 = arith.subf %100, %101 : vector<8x128xf32>
    %103 = arith.mulf %84, %22 : vector<8x128xf32>
    %104 = arith.addf %103, %96 : vector<8x128xf32>
    %105 = arith.mulf %84, %25 : vector<8x128xf32>
    %106 = arith.addf %105, %99 : vector<8x128xf32>
    %107 = arith.mulf %84, %28 : vector<8x128xf32>
    %108 = arith.addf %107, %102 : vector<8x128xf32>
    %109 = arith.mulf %90, %108 : vector<8x128xf32>
    %110 = arith.mulf %93, %106 : vector<8x128xf32>
    %111 = arith.subf %109, %110 : vector<8x128xf32>
    %112 = arith.mulf %93, %104 : vector<8x128xf32>
    %113 = arith.mulf %87, %108 : vector<8x128xf32>
    %114 = arith.subf %112, %113 : vector<8x128xf32>
    %115 = arith.mulf %87, %106 : vector<8x128xf32>
    %116 = arith.mulf %90, %104 : vector<8x128xf32>
    %117 = arith.subf %115, %116 : vector<8x128xf32>
    %cst_30 = arith.constant 2.000000e+00 : f32
    %118 = vector.broadcast %cst_30 : f32 to vector<8x128xf32>
    %119 = arith.mulf %118, %111 : vector<8x128xf32>
    %120 = arith.addf %22, %119 : vector<8x128xf32>
    %cst_31 = arith.constant 2.000000e+00 : f32
    %121 = vector.broadcast %cst_31 : f32 to vector<8x128xf32>
    %122 = arith.mulf %121, %114 : vector<8x128xf32>
    %123 = arith.addf %25, %122 : vector<8x128xf32>
    %cst_32 = arith.constant 2.000000e+00 : f32
    %124 = vector.broadcast %cst_32 : f32 to vector<8x128xf32>
    %125 = arith.mulf %124, %117 : vector<8x128xf32>
    %126 = arith.addf %28, %125 : vector<8x128xf32>
    %127 = arith.mulf %13, %31 : vector<8x128xf32>
    %128 = arith.mulf %16, %34 : vector<8x128xf32>
    %129 = arith.addf %127, %128 : vector<8x128xf32>
    %130 = arith.mulf %19, %37 : vector<8x128xf32>
    %131 = arith.addf %129, %130 : vector<8x128xf32>
    %132 = arith.mulf %16, %37 : vector<8x128xf32>
    %133 = arith.mulf %19, %34 : vector<8x128xf32>
    %134 = arith.subf %132, %133 : vector<8x128xf32>
    %135 = arith.mulf %19, %31 : vector<8x128xf32>
    %136 = arith.mulf %13, %37 : vector<8x128xf32>
    %137 = arith.subf %135, %136 : vector<8x128xf32>
    %138 = arith.mulf %13, %34 : vector<8x128xf32>
    %139 = arith.mulf %16, %31 : vector<8x128xf32>
    %140 = arith.subf %138, %139 : vector<8x128xf32>
    %141 = arith.mulf %83, %31 : vector<8x128xf32>
    %cst_33 = arith.constant 2.000000e+00 : f32
    %142 = vector.broadcast %cst_33 : f32 to vector<8x128xf32>
    %143 = arith.mulf %142, %134 : vector<8x128xf32>
    %144 = arith.addf %141, %143 : vector<8x128xf32>
    %cst_34 = arith.constant 2.000000e+00 : f32
    %145 = vector.broadcast %cst_34 : f32 to vector<8x128xf32>
    %146 = arith.mulf %145, %131 : vector<8x128xf32>
    %147 = arith.mulf %146, %13 : vector<8x128xf32>
    %148 = arith.addf %144, %147 : vector<8x128xf32>
    %cst_35 = arith.constant 2.500000e-01 : f32
    %149 = vector.broadcast %cst_35 : f32 to vector<8x128xf32>
    %150 = arith.mulf %149, %148 : vector<8x128xf32>
    %151 = arith.mulf %83, %34 : vector<8x128xf32>
    %cst_36 = arith.constant 2.000000e+00 : f32
    %152 = vector.broadcast %cst_36 : f32 to vector<8x128xf32>
    %153 = arith.mulf %152, %137 : vector<8x128xf32>
    %154 = arith.addf %151, %153 : vector<8x128xf32>
    %cst_37 = arith.constant 2.000000e+00 : f32
    %155 = vector.broadcast %cst_37 : f32 to vector<8x128xf32>
    %156 = arith.mulf %155, %131 : vector<8x128xf32>
    %157 = arith.mulf %156, %16 : vector<8x128xf32>
    %158 = arith.addf %154, %157 : vector<8x128xf32>
    %cst_38 = arith.constant 2.500000e-01 : f32
    %159 = vector.broadcast %cst_38 : f32 to vector<8x128xf32>
    %160 = arith.mulf %159, %158 : vector<8x128xf32>
    %161 = arith.mulf %83, %37 : vector<8x128xf32>
    %cst_39 = arith.constant 2.000000e+00 : f32
    %162 = vector.broadcast %cst_39 : f32 to vector<8x128xf32>
    %163 = arith.mulf %162, %140 : vector<8x128xf32>
    %164 = arith.addf %161, %163 : vector<8x128xf32>
    %cst_40 = arith.constant 2.000000e+00 : f32
    %165 = vector.broadcast %cst_40 : f32 to vector<8x128xf32>
    %166 = arith.mulf %165, %131 : vector<8x128xf32>
    %167 = arith.mulf %166, %19 : vector<8x128xf32>
    %168 = arith.addf %164, %167 : vector<8x128xf32>
    %cst_41 = arith.constant 2.500000e-01 : f32
    %169 = vector.broadcast %cst_41 : f32 to vector<8x128xf32>
    %170 = arith.mulf %169, %168 : vector<8x128xf32>
    %171 = arith.mulf %87, %93 : vector<8x128xf32>
    %172 = arith.mulf %90, %84 : vector<8x128xf32>
    %173 = arith.subf %171, %172 : vector<8x128xf32>
    %cst_42 = arith.constant -1.962000e+01 : f32
    %174 = vector.broadcast %cst_42 : f32 to vector<8x128xf32>
    %175 = arith.mulf %174, %173 : vector<8x128xf32>
    %176 = arith.mulf %90, %93 : vector<8x128xf32>
    %177 = arith.mulf %87, %84 : vector<8x128xf32>
    %178 = arith.addf %176, %177 : vector<8x128xf32>
    %cst_43 = arith.constant -1.962000e+01 : f32
    %179 = vector.broadcast %cst_43 : f32 to vector<8x128xf32>
    %180 = arith.mulf %179, %178 : vector<8x128xf32>
    %181 = arith.mulf %87, %87 : vector<8x128xf32>
    %182 = arith.mulf %90, %90 : vector<8x128xf32>
    %183 = arith.addf %181, %182 : vector<8x128xf32>
    %cst_44 = arith.constant 2.000000e+00 : f32
    %184 = vector.broadcast %cst_44 : f32 to vector<8x128xf32>
    %185 = arith.mulf %184, %183 : vector<8x128xf32>
    %cst_45 = arith.constant 1.000000e+00 : f32
    %186 = vector.broadcast %cst_45 : f32 to vector<8x128xf32>
    %187 = arith.subf %186, %185 : vector<8x128xf32>
    %cst_46 = arith.constant -9.810000e+00 : f32
    %188 = vector.broadcast %cst_46 : f32 to vector<8x128xf32>
    %189 = arith.mulf %188, %187 : vector<8x128xf32>
    %190 = arith.mulf %34, %28 : vector<8x128xf32>
    %191 = arith.mulf %37, %25 : vector<8x128xf32>
    %192 = arith.subf %190, %191 : vector<8x128xf32>
    %193 = arith.mulf %37, %22 : vector<8x128xf32>
    %194 = arith.mulf %31, %28 : vector<8x128xf32>
    %195 = arith.subf %193, %194 : vector<8x128xf32>
    %196 = arith.mulf %31, %25 : vector<8x128xf32>
    %197 = arith.mulf %34, %22 : vector<8x128xf32>
    %198 = arith.subf %196, %197 : vector<8x128xf32>
    %199 = arith.subf %175, %192 : vector<8x128xf32>
    %200 = arith.subf %180, %195 : vector<8x128xf32>
    %201 = arith.addf %56, %189 : vector<8x128xf32>
    %202 = arith.subf %201, %198 : vector<8x128xf32>
    %cst_47 = arith.constant 0.0156608894 : f32
    %203 = vector.broadcast %cst_47 : f32 to vector<8x128xf32>
    %204 = arith.mulf %203, %31 : vector<8x128xf32>
    %cst_48 = arith.constant 3.180370e-06 : f32
    %205 = vector.broadcast %cst_48 : f32 to vector<8x128xf32>
    %206 = arith.mulf %205, %34 : vector<8x128xf32>
    %207 = arith.addf %204, %206 : vector<8x128xf32>
    %cst_49 = arith.constant 3.180370e-06 : f32
    %208 = vector.broadcast %cst_49 : f32 to vector<8x128xf32>
    %209 = arith.mulf %208, %31 : vector<8x128xf32>
    %cst_50 = arith.constant 0.0156207802 : f32
    %210 = vector.broadcast %cst_50 : f32 to vector<8x128xf32>
    %211 = arith.mulf %210, %34 : vector<8x128xf32>
    %212 = arith.addf %209, %211 : vector<8x128xf32>
    %cst_51 = arith.constant 0.0222686809 : f32
    %213 = vector.broadcast %cst_51 : f32 to vector<8x128xf32>
    %214 = arith.mulf %213, %37 : vector<8x128xf32>
    %215 = arith.mulf %34, %214 : vector<8x128xf32>
    %216 = arith.mulf %37, %212 : vector<8x128xf32>
    %217 = arith.subf %215, %216 : vector<8x128xf32>
    %218 = arith.mulf %37, %207 : vector<8x128xf32>
    %219 = arith.mulf %31, %214 : vector<8x128xf32>
    %220 = arith.subf %218, %219 : vector<8x128xf32>
    %221 = arith.mulf %31, %212 : vector<8x128xf32>
    %222 = arith.mulf %34, %207 : vector<8x128xf32>
    %223 = arith.subf %221, %222 : vector<8x128xf32>
    %224 = arith.subf %61, %217 : vector<8x128xf32>
    %225 = arith.subf %68, %220 : vector<8x128xf32>
    %226 = arith.subf %73, %223 : vector<8x128xf32>
    %cst_52 = arith.constant 63.8533363 : f32
    %227 = vector.broadcast %cst_52 : f32 to vector<8x128xf32>
    %228 = arith.mulf %227, %224 : vector<8x128xf32>
    %cst_53 = arith.constant -0.0130004538 : f32
    %229 = vector.broadcast %cst_53 : f32 to vector<8x128xf32>
    %230 = arith.mulf %229, %225 : vector<8x128xf32>
    %231 = arith.addf %228, %230 : vector<8x128xf32>
    %cst_54 = arith.constant -0.0130004538 : f32
    %232 = vector.broadcast %cst_54 : f32 to vector<8x128xf32>
    %233 = arith.mulf %232, %224 : vector<8x128xf32>
    %cst_55 = arith.constant 64.0172882 : f32
    %234 = vector.broadcast %cst_55 : f32 to vector<8x128xf32>
    %235 = arith.mulf %234, %225 : vector<8x128xf32>
    %236 = arith.addf %233, %235 : vector<8x128xf32>
    %cst_56 = arith.constant 44.9061165 : f32
    %237 = vector.broadcast %cst_56 : f32 to vector<8x128xf32>
    %238 = arith.mulf %237, %226 : vector<8x128xf32>
    %cst_57 = arith.constant 2.500000e-02 : f32
    %239 = vector.broadcast %cst_57 : f32 to vector<8x128xf32>
    %240 = arith.mulf %239, %150 : vector<8x128xf32>
    %241 = arith.addf %13, %240 : vector<8x128xf32>
    %cst_58 = arith.constant 2.500000e-02 : f32
    %242 = vector.broadcast %cst_58 : f32 to vector<8x128xf32>
    %243 = arith.mulf %242, %160 : vector<8x128xf32>
    %244 = arith.addf %16, %243 : vector<8x128xf32>
    %cst_59 = arith.constant 2.500000e-02 : f32
    %245 = vector.broadcast %cst_59 : f32 to vector<8x128xf32>
    %246 = arith.mulf %245, %170 : vector<8x128xf32>
    %247 = arith.addf %19, %246 : vector<8x128xf32>
    %cst_60 = arith.constant 2.500000e-02 : f32
    %248 = vector.broadcast %cst_60 : f32 to vector<8x128xf32>
    %249 = arith.mulf %248, %199 : vector<8x128xf32>
    %250 = arith.addf %22, %249 : vector<8x128xf32>
    %cst_61 = arith.constant 2.500000e-02 : f32
    %251 = vector.broadcast %cst_61 : f32 to vector<8x128xf32>
    %252 = arith.mulf %251, %200 : vector<8x128xf32>
    %253 = arith.addf %25, %252 : vector<8x128xf32>
    %cst_62 = arith.constant 2.500000e-02 : f32
    %254 = vector.broadcast %cst_62 : f32 to vector<8x128xf32>
    %255 = arith.mulf %254, %202 : vector<8x128xf32>
    %256 = arith.addf %28, %255 : vector<8x128xf32>
    %cst_63 = arith.constant 2.500000e-02 : f32
    %257 = vector.broadcast %cst_63 : f32 to vector<8x128xf32>
    %258 = arith.mulf %257, %231 : vector<8x128xf32>
    %259 = arith.addf %31, %258 : vector<8x128xf32>
    %cst_64 = arith.constant 2.500000e-02 : f32
    %260 = vector.broadcast %cst_64 : f32 to vector<8x128xf32>
    %261 = arith.mulf %260, %236 : vector<8x128xf32>
    %262 = arith.addf %34, %261 : vector<8x128xf32>
    %cst_65 = arith.constant 2.500000e-02 : f32
    %263 = vector.broadcast %cst_65 : f32 to vector<8x128xf32>
    %264 = arith.mulf %263, %238 : vector<8x128xf32>
    %265 = arith.addf %37, %264 : vector<8x128xf32>
    %266 = arith.mulf %241, %241 : vector<8x128xf32>
    %267 = arith.mulf %244, %244 : vector<8x128xf32>
    %268 = arith.addf %266, %267 : vector<8x128xf32>
    %269 = arith.mulf %247, %247 : vector<8x128xf32>
    %270 = arith.addf %268, %269 : vector<8x128xf32>
    %cst_66 = arith.constant 1.000000e+00 : f32
    %271 = vector.broadcast %cst_66 : f32 to vector<8x128xf32>
    %272 = arith.addf %271, %270 : vector<8x128xf32>
    %273 = tpu.reciprocal %272 {approx = true} : vector<8x128xf32> -> vector<8x128xf32>
    %cst_67 = arith.constant 1.000000e+00 : f32
    %274 = vector.broadcast %cst_67 : f32 to vector<8x128xf32>
    %275 = arith.subf %274, %270 : vector<8x128xf32>
    %276 = arith.mulf %275, %273 : vector<8x128xf32>
    %cst_68 = arith.constant 2.000000e+00 : f32
    %277 = vector.broadcast %cst_68 : f32 to vector<8x128xf32>
    %278 = arith.mulf %277, %241 : vector<8x128xf32>
    %279 = arith.mulf %278, %273 : vector<8x128xf32>
    %cst_69 = arith.constant 2.000000e+00 : f32
    %280 = vector.broadcast %cst_69 : f32 to vector<8x128xf32>
    %281 = arith.mulf %280, %244 : vector<8x128xf32>
    %282 = arith.mulf %281, %273 : vector<8x128xf32>
    %cst_70 = arith.constant 2.000000e+00 : f32
    %283 = vector.broadcast %cst_70 : f32 to vector<8x128xf32>
    %284 = arith.mulf %283, %247 : vector<8x128xf32>
    %285 = arith.mulf %284, %273 : vector<8x128xf32>
    %286 = arith.mulf %282, %256 : vector<8x128xf32>
    %287 = arith.mulf %285, %253 : vector<8x128xf32>
    %288 = arith.subf %286, %287 : vector<8x128xf32>
    %289 = arith.mulf %285, %250 : vector<8x128xf32>
    %290 = arith.mulf %279, %256 : vector<8x128xf32>
    %291 = arith.subf %289, %290 : vector<8x128xf32>
    %292 = arith.mulf %279, %253 : vector<8x128xf32>
    %293 = arith.mulf %282, %250 : vector<8x128xf32>
    %294 = arith.subf %292, %293 : vector<8x128xf32>
    %295 = arith.mulf %276, %250 : vector<8x128xf32>
    %296 = arith.addf %295, %288 : vector<8x128xf32>
    %297 = arith.mulf %276, %253 : vector<8x128xf32>
    %298 = arith.addf %297, %291 : vector<8x128xf32>
    %299 = arith.mulf %276, %256 : vector<8x128xf32>
    %300 = arith.addf %299, %294 : vector<8x128xf32>
    %301 = arith.mulf %282, %300 : vector<8x128xf32>
    %302 = arith.mulf %285, %298 : vector<8x128xf32>
    %303 = arith.subf %301, %302 : vector<8x128xf32>
    %304 = arith.mulf %285, %296 : vector<8x128xf32>
    %305 = arith.mulf %279, %300 : vector<8x128xf32>
    %306 = arith.subf %304, %305 : vector<8x128xf32>
    %307 = arith.mulf %279, %298 : vector<8x128xf32>
    %308 = arith.mulf %282, %296 : vector<8x128xf32>
    %309 = arith.subf %307, %308 : vector<8x128xf32>
    %cst_71 = arith.constant 2.000000e+00 : f32
    %310 = vector.broadcast %cst_71 : f32 to vector<8x128xf32>
    %311 = arith.mulf %310, %303 : vector<8x128xf32>
    %312 = arith.addf %250, %311 : vector<8x128xf32>
    %cst_72 = arith.constant 2.000000e+00 : f32
    %313 = vector.broadcast %cst_72 : f32 to vector<8x128xf32>
    %314 = arith.mulf %313, %306 : vector<8x128xf32>
    %315 = arith.addf %253, %314 : vector<8x128xf32>
    %cst_73 = arith.constant 2.000000e+00 : f32
    %316 = vector.broadcast %cst_73 : f32 to vector<8x128xf32>
    %317 = arith.mulf %316, %309 : vector<8x128xf32>
    %318 = arith.addf %256, %317 : vector<8x128xf32>
    %319 = arith.mulf %241, %259 : vector<8x128xf32>
    %320 = arith.mulf %244, %262 : vector<8x128xf32>
    %321 = arith.addf %319, %320 : vector<8x128xf32>
    %322 = arith.mulf %247, %265 : vector<8x128xf32>
    %323 = arith.addf %321, %322 : vector<8x128xf32>
    %324 = arith.mulf %244, %265 : vector<8x128xf32>
    %325 = arith.mulf %247, %262 : vector<8x128xf32>
    %326 = arith.subf %324, %325 : vector<8x128xf32>
    %327 = arith.mulf %247, %259 : vector<8x128xf32>
    %328 = arith.mulf %241, %265 : vector<8x128xf32>
    %329 = arith.subf %327, %328 : vector<8x128xf32>
    %330 = arith.mulf %241, %262 : vector<8x128xf32>
    %331 = arith.mulf %244, %259 : vector<8x128xf32>
    %332 = arith.subf %330, %331 : vector<8x128xf32>
    %333 = arith.mulf %275, %259 : vector<8x128xf32>
    %cst_74 = arith.constant 2.000000e+00 : f32
    %334 = vector.broadcast %cst_74 : f32 to vector<8x128xf32>
    %335 = arith.mulf %334, %326 : vector<8x128xf32>
    %336 = arith.addf %333, %335 : vector<8x128xf32>
    %cst_75 = arith.constant 2.000000e+00 : f32
    %337 = vector.broadcast %cst_75 : f32 to vector<8x128xf32>
    %338 = arith.mulf %337, %323 : vector<8x128xf32>
    %339 = arith.mulf %338, %241 : vector<8x128xf32>
    %340 = arith.addf %336, %339 : vector<8x128xf32>
    %cst_76 = arith.constant 2.500000e-01 : f32
    %341 = vector.broadcast %cst_76 : f32 to vector<8x128xf32>
    %342 = arith.mulf %341, %340 : vector<8x128xf32>
    %343 = arith.mulf %275, %262 : vector<8x128xf32>
    %cst_77 = arith.constant 2.000000e+00 : f32
    %344 = vector.broadcast %cst_77 : f32 to vector<8x128xf32>
    %345 = arith.mulf %344, %329 : vector<8x128xf32>
    %346 = arith.addf %343, %345 : vector<8x128xf32>
    %cst_78 = arith.constant 2.000000e+00 : f32
    %347 = vector.broadcast %cst_78 : f32 to vector<8x128xf32>
    %348 = arith.mulf %347, %323 : vector<8x128xf32>
    %349 = arith.mulf %348, %244 : vector<8x128xf32>
    %350 = arith.addf %346, %349 : vector<8x128xf32>
    %cst_79 = arith.constant 2.500000e-01 : f32
    %351 = vector.broadcast %cst_79 : f32 to vector<8x128xf32>
    %352 = arith.mulf %351, %350 : vector<8x128xf32>
    %353 = arith.mulf %275, %265 : vector<8x128xf32>
    %cst_80 = arith.constant 2.000000e+00 : f32
    %354 = vector.broadcast %cst_80 : f32 to vector<8x128xf32>
    %355 = arith.mulf %354, %332 : vector<8x128xf32>
    %356 = arith.addf %353, %355 : vector<8x128xf32>
    %cst_81 = arith.constant 2.000000e+00 : f32
    %357 = vector.broadcast %cst_81 : f32 to vector<8x128xf32>
    %358 = arith.mulf %357, %323 : vector<8x128xf32>
    %359 = arith.mulf %358, %247 : vector<8x128xf32>
    %360 = arith.addf %356, %359 : vector<8x128xf32>
    %cst_82 = arith.constant 2.500000e-01 : f32
    %361 = vector.broadcast %cst_82 : f32 to vector<8x128xf32>
    %362 = arith.mulf %361, %360 : vector<8x128xf32>
    %363 = arith.mulf %279, %285 : vector<8x128xf32>
    %364 = arith.mulf %282, %276 : vector<8x128xf32>
    %365 = arith.subf %363, %364 : vector<8x128xf32>
    %cst_83 = arith.constant -1.962000e+01 : f32
    %366 = vector.broadcast %cst_83 : f32 to vector<8x128xf32>
    %367 = arith.mulf %366, %365 : vector<8x128xf32>
    %368 = arith.mulf %282, %285 : vector<8x128xf32>
    %369 = arith.mulf %279, %276 : vector<8x128xf32>
    %370 = arith.addf %368, %369 : vector<8x128xf32>
    %cst_84 = arith.constant -1.962000e+01 : f32
    %371 = vector.broadcast %cst_84 : f32 to vector<8x128xf32>
    %372 = arith.mulf %371, %370 : vector<8x128xf32>
    %373 = arith.mulf %279, %279 : vector<8x128xf32>
    %374 = arith.mulf %282, %282 : vector<8x128xf32>
    %375 = arith.addf %373, %374 : vector<8x128xf32>
    %cst_85 = arith.constant 2.000000e+00 : f32
    %376 = vector.broadcast %cst_85 : f32 to vector<8x128xf32>
    %377 = arith.mulf %376, %375 : vector<8x128xf32>
    %cst_86 = arith.constant 1.000000e+00 : f32
    %378 = vector.broadcast %cst_86 : f32 to vector<8x128xf32>
    %379 = arith.subf %378, %377 : vector<8x128xf32>
    %cst_87 = arith.constant -9.810000e+00 : f32
    %380 = vector.broadcast %cst_87 : f32 to vector<8x128xf32>
    %381 = arith.mulf %380, %379 : vector<8x128xf32>
    %382 = arith.mulf %262, %256 : vector<8x128xf32>
    %383 = arith.mulf %265, %253 : vector<8x128xf32>
    %384 = arith.subf %382, %383 : vector<8x128xf32>
    %385 = arith.mulf %265, %250 : vector<8x128xf32>
    %386 = arith.mulf %259, %256 : vector<8x128xf32>
    %387 = arith.subf %385, %386 : vector<8x128xf32>
    %388 = arith.mulf %259, %253 : vector<8x128xf32>
    %389 = arith.mulf %262, %250 : vector<8x128xf32>
    %390 = arith.subf %388, %389 : vector<8x128xf32>
    %391 = arith.subf %367, %384 : vector<8x128xf32>
    %392 = arith.subf %372, %387 : vector<8x128xf32>
    %393 = arith.addf %56, %381 : vector<8x128xf32>
    %394 = arith.subf %393, %390 : vector<8x128xf32>
    %cst_88 = arith.constant 0.0156608894 : f32
    %395 = vector.broadcast %cst_88 : f32 to vector<8x128xf32>
    %396 = arith.mulf %395, %259 : vector<8x128xf32>
    %cst_89 = arith.constant 3.180370e-06 : f32
    %397 = vector.broadcast %cst_89 : f32 to vector<8x128xf32>
    %398 = arith.mulf %397, %262 : vector<8x128xf32>
    %399 = arith.addf %396, %398 : vector<8x128xf32>
    %cst_90 = arith.constant 3.180370e-06 : f32
    %400 = vector.broadcast %cst_90 : f32 to vector<8x128xf32>
    %401 = arith.mulf %400, %259 : vector<8x128xf32>
    %cst_91 = arith.constant 0.0156207802 : f32
    %402 = vector.broadcast %cst_91 : f32 to vector<8x128xf32>
    %403 = arith.mulf %402, %262 : vector<8x128xf32>
    %404 = arith.addf %401, %403 : vector<8x128xf32>
    %cst_92 = arith.constant 0.0222686809 : f32
    %405 = vector.broadcast %cst_92 : f32 to vector<8x128xf32>
    %406 = arith.mulf %405, %265 : vector<8x128xf32>
    %407 = arith.mulf %262, %406 : vector<8x128xf32>
    %408 = arith.mulf %265, %404 : vector<8x128xf32>
    %409 = arith.subf %407, %408 : vector<8x128xf32>
    %410 = arith.mulf %265, %399 : vector<8x128xf32>
    %411 = arith.mulf %259, %406 : vector<8x128xf32>
    %412 = arith.subf %410, %411 : vector<8x128xf32>
    %413 = arith.mulf %259, %404 : vector<8x128xf32>
    %414 = arith.mulf %262, %399 : vector<8x128xf32>
    %415 = arith.subf %413, %414 : vector<8x128xf32>
    %416 = arith.subf %61, %409 : vector<8x128xf32>
    %417 = arith.subf %68, %412 : vector<8x128xf32>
    %418 = arith.subf %73, %415 : vector<8x128xf32>
    %cst_93 = arith.constant 63.8533363 : f32
    %419 = vector.broadcast %cst_93 : f32 to vector<8x128xf32>
    %420 = arith.mulf %419, %416 : vector<8x128xf32>
    %cst_94 = arith.constant -0.0130004538 : f32
    %421 = vector.broadcast %cst_94 : f32 to vector<8x128xf32>
    %422 = arith.mulf %421, %417 : vector<8x128xf32>
    %423 = arith.addf %420, %422 : vector<8x128xf32>
    %cst_95 = arith.constant -0.0130004538 : f32
    %424 = vector.broadcast %cst_95 : f32 to vector<8x128xf32>
    %425 = arith.mulf %424, %416 : vector<8x128xf32>
    %cst_96 = arith.constant 64.0172882 : f32
    %426 = vector.broadcast %cst_96 : f32 to vector<8x128xf32>
    %427 = arith.mulf %426, %417 : vector<8x128xf32>
    %428 = arith.addf %425, %427 : vector<8x128xf32>
    %cst_97 = arith.constant 44.9061165 : f32
    %429 = vector.broadcast %cst_97 : f32 to vector<8x128xf32>
    %430 = arith.mulf %429, %418 : vector<8x128xf32>
    %cst_98 = arith.constant 2.000000e+00 : f32
    %431 = vector.broadcast %cst_98 : f32 to vector<8x128xf32>
    %432 = arith.mulf %431, %312 : vector<8x128xf32>
    %433 = arith.addf %120, %432 : vector<8x128xf32>
    %cst_99 = arith.constant 2.000000e+00 : f32
    %434 = vector.broadcast %cst_99 : f32 to vector<8x128xf32>
    %435 = arith.mulf %434, %315 : vector<8x128xf32>
    %436 = arith.addf %123, %435 : vector<8x128xf32>
    %cst_100 = arith.constant 2.000000e+00 : f32
    %437 = vector.broadcast %cst_100 : f32 to vector<8x128xf32>
    %438 = arith.mulf %437, %318 : vector<8x128xf32>
    %439 = arith.addf %126, %438 : vector<8x128xf32>
    %cst_101 = arith.constant 2.000000e+00 : f32
    %440 = vector.broadcast %cst_101 : f32 to vector<8x128xf32>
    %441 = arith.mulf %440, %342 : vector<8x128xf32>
    %442 = arith.addf %150, %441 : vector<8x128xf32>
    %cst_102 = arith.constant 2.000000e+00 : f32
    %443 = vector.broadcast %cst_102 : f32 to vector<8x128xf32>
    %444 = arith.mulf %443, %352 : vector<8x128xf32>
    %445 = arith.addf %160, %444 : vector<8x128xf32>
    %cst_103 = arith.constant 2.000000e+00 : f32
    %446 = vector.broadcast %cst_103 : f32 to vector<8x128xf32>
    %447 = arith.mulf %446, %362 : vector<8x128xf32>
    %448 = arith.addf %170, %447 : vector<8x128xf32>
    %cst_104 = arith.constant 2.000000e+00 : f32
    %449 = vector.broadcast %cst_104 : f32 to vector<8x128xf32>
    %450 = arith.mulf %449, %391 : vector<8x128xf32>
    %451 = arith.addf %199, %450 : vector<8x128xf32>
    %cst_105 = arith.constant 2.000000e+00 : f32
    %452 = vector.broadcast %cst_105 : f32 to vector<8x128xf32>
    %453 = arith.mulf %452, %392 : vector<8x128xf32>
    %454 = arith.addf %200, %453 : vector<8x128xf32>
    %cst_106 = arith.constant 2.000000e+00 : f32
    %455 = vector.broadcast %cst_106 : f32 to vector<8x128xf32>
    %456 = arith.mulf %455, %394 : vector<8x128xf32>
    %457 = arith.addf %202, %456 : vector<8x128xf32>
    %cst_107 = arith.constant 2.000000e+00 : f32
    %458 = vector.broadcast %cst_107 : f32 to vector<8x128xf32>
    %459 = arith.mulf %458, %423 : vector<8x128xf32>
    %460 = arith.addf %231, %459 : vector<8x128xf32>
    %cst_108 = arith.constant 2.000000e+00 : f32
    %461 = vector.broadcast %cst_108 : f32 to vector<8x128xf32>
    %462 = arith.mulf %461, %428 : vector<8x128xf32>
    %463 = arith.addf %236, %462 : vector<8x128xf32>
    %cst_109 = arith.constant 2.000000e+00 : f32
    %464 = vector.broadcast %cst_109 : f32 to vector<8x128xf32>
    %465 = arith.mulf %464, %430 : vector<8x128xf32>
    %466 = arith.addf %238, %465 : vector<8x128xf32>
    %cst_110 = arith.constant 2.500000e-02 : f32
    %467 = vector.broadcast %cst_110 : f32 to vector<8x128xf32>
    %468 = arith.mulf %467, %342 : vector<8x128xf32>
    %469 = arith.addf %13, %468 : vector<8x128xf32>
    %cst_111 = arith.constant 2.500000e-02 : f32
    %470 = vector.broadcast %cst_111 : f32 to vector<8x128xf32>
    %471 = arith.mulf %470, %352 : vector<8x128xf32>
    %472 = arith.addf %16, %471 : vector<8x128xf32>
    %cst_112 = arith.constant 2.500000e-02 : f32
    %473 = vector.broadcast %cst_112 : f32 to vector<8x128xf32>
    %474 = arith.mulf %473, %362 : vector<8x128xf32>
    %475 = arith.addf %19, %474 : vector<8x128xf32>
    %cst_113 = arith.constant 2.500000e-02 : f32
    %476 = vector.broadcast %cst_113 : f32 to vector<8x128xf32>
    %477 = arith.mulf %476, %391 : vector<8x128xf32>
    %478 = arith.addf %22, %477 : vector<8x128xf32>
    %cst_114 = arith.constant 2.500000e-02 : f32
    %479 = vector.broadcast %cst_114 : f32 to vector<8x128xf32>
    %480 = arith.mulf %479, %392 : vector<8x128xf32>
    %481 = arith.addf %25, %480 : vector<8x128xf32>
    %cst_115 = arith.constant 2.500000e-02 : f32
    %482 = vector.broadcast %cst_115 : f32 to vector<8x128xf32>
    %483 = arith.mulf %482, %394 : vector<8x128xf32>
    %484 = arith.addf %28, %483 : vector<8x128xf32>
    %cst_116 = arith.constant 2.500000e-02 : f32
    %485 = vector.broadcast %cst_116 : f32 to vector<8x128xf32>
    %486 = arith.mulf %485, %423 : vector<8x128xf32>
    %487 = arith.addf %31, %486 : vector<8x128xf32>
    %cst_117 = arith.constant 2.500000e-02 : f32
    %488 = vector.broadcast %cst_117 : f32 to vector<8x128xf32>
    %489 = arith.mulf %488, %428 : vector<8x128xf32>
    %490 = arith.addf %34, %489 : vector<8x128xf32>
    %cst_118 = arith.constant 2.500000e-02 : f32
    %491 = vector.broadcast %cst_118 : f32 to vector<8x128xf32>
    %492 = arith.mulf %491, %430 : vector<8x128xf32>
    %493 = arith.addf %37, %492 : vector<8x128xf32>
    %494 = arith.mulf %469, %469 : vector<8x128xf32>
    %495 = arith.mulf %472, %472 : vector<8x128xf32>
    %496 = arith.addf %494, %495 : vector<8x128xf32>
    %497 = arith.mulf %475, %475 : vector<8x128xf32>
    %498 = arith.addf %496, %497 : vector<8x128xf32>
    %cst_119 = arith.constant 1.000000e+00 : f32
    %499 = vector.broadcast %cst_119 : f32 to vector<8x128xf32>
    %500 = arith.addf %499, %498 : vector<8x128xf32>
    %501 = tpu.reciprocal %500 {approx = true} : vector<8x128xf32> -> vector<8x128xf32>
    %cst_120 = arith.constant 1.000000e+00 : f32
    %502 = vector.broadcast %cst_120 : f32 to vector<8x128xf32>
    %503 = arith.subf %502, %498 : vector<8x128xf32>
    %504 = arith.mulf %503, %501 : vector<8x128xf32>
    %cst_121 = arith.constant 2.000000e+00 : f32
    %505 = vector.broadcast %cst_121 : f32 to vector<8x128xf32>
    %506 = arith.mulf %505, %469 : vector<8x128xf32>
    %507 = arith.mulf %506, %501 : vector<8x128xf32>
    %cst_122 = arith.constant 2.000000e+00 : f32
    %508 = vector.broadcast %cst_122 : f32 to vector<8x128xf32>
    %509 = arith.mulf %508, %472 : vector<8x128xf32>
    %510 = arith.mulf %509, %501 : vector<8x128xf32>
    %cst_123 = arith.constant 2.000000e+00 : f32
    %511 = vector.broadcast %cst_123 : f32 to vector<8x128xf32>
    %512 = arith.mulf %511, %475 : vector<8x128xf32>
    %513 = arith.mulf %512, %501 : vector<8x128xf32>
    %514 = arith.mulf %510, %484 : vector<8x128xf32>
    %515 = arith.mulf %513, %481 : vector<8x128xf32>
    %516 = arith.subf %514, %515 : vector<8x128xf32>
    %517 = arith.mulf %513, %478 : vector<8x128xf32>
    %518 = arith.mulf %507, %484 : vector<8x128xf32>
    %519 = arith.subf %517, %518 : vector<8x128xf32>
    %520 = arith.mulf %507, %481 : vector<8x128xf32>
    %521 = arith.mulf %510, %478 : vector<8x128xf32>
    %522 = arith.subf %520, %521 : vector<8x128xf32>
    %523 = arith.mulf %504, %478 : vector<8x128xf32>
    %524 = arith.addf %523, %516 : vector<8x128xf32>
    %525 = arith.mulf %504, %481 : vector<8x128xf32>
    %526 = arith.addf %525, %519 : vector<8x128xf32>
    %527 = arith.mulf %504, %484 : vector<8x128xf32>
    %528 = arith.addf %527, %522 : vector<8x128xf32>
    %529 = arith.mulf %510, %528 : vector<8x128xf32>
    %530 = arith.mulf %513, %526 : vector<8x128xf32>
    %531 = arith.subf %529, %530 : vector<8x128xf32>
    %532 = arith.mulf %513, %524 : vector<8x128xf32>
    %533 = arith.mulf %507, %528 : vector<8x128xf32>
    %534 = arith.subf %532, %533 : vector<8x128xf32>
    %535 = arith.mulf %507, %526 : vector<8x128xf32>
    %536 = arith.mulf %510, %524 : vector<8x128xf32>
    %537 = arith.subf %535, %536 : vector<8x128xf32>
    %cst_124 = arith.constant 2.000000e+00 : f32
    %538 = vector.broadcast %cst_124 : f32 to vector<8x128xf32>
    %539 = arith.mulf %538, %531 : vector<8x128xf32>
    %540 = arith.addf %478, %539 : vector<8x128xf32>
    %cst_125 = arith.constant 2.000000e+00 : f32
    %541 = vector.broadcast %cst_125 : f32 to vector<8x128xf32>
    %542 = arith.mulf %541, %534 : vector<8x128xf32>
    %543 = arith.addf %481, %542 : vector<8x128xf32>
    %cst_126 = arith.constant 2.000000e+00 : f32
    %544 = vector.broadcast %cst_126 : f32 to vector<8x128xf32>
    %545 = arith.mulf %544, %537 : vector<8x128xf32>
    %546 = arith.addf %484, %545 : vector<8x128xf32>
    %547 = arith.mulf %469, %487 : vector<8x128xf32>
    %548 = arith.mulf %472, %490 : vector<8x128xf32>
    %549 = arith.addf %547, %548 : vector<8x128xf32>
    %550 = arith.mulf %475, %493 : vector<8x128xf32>
    %551 = arith.addf %549, %550 : vector<8x128xf32>
    %552 = arith.mulf %472, %493 : vector<8x128xf32>
    %553 = arith.mulf %475, %490 : vector<8x128xf32>
    %554 = arith.subf %552, %553 : vector<8x128xf32>
    %555 = arith.mulf %475, %487 : vector<8x128xf32>
    %556 = arith.mulf %469, %493 : vector<8x128xf32>
    %557 = arith.subf %555, %556 : vector<8x128xf32>
    %558 = arith.mulf %469, %490 : vector<8x128xf32>
    %559 = arith.mulf %472, %487 : vector<8x128xf32>
    %560 = arith.subf %558, %559 : vector<8x128xf32>
    %561 = arith.mulf %503, %487 : vector<8x128xf32>
    %cst_127 = arith.constant 2.000000e+00 : f32
    %562 = vector.broadcast %cst_127 : f32 to vector<8x128xf32>
    %563 = arith.mulf %562, %554 : vector<8x128xf32>
    %564 = arith.addf %561, %563 : vector<8x128xf32>
    %cst_128 = arith.constant 2.000000e+00 : f32
    %565 = vector.broadcast %cst_128 : f32 to vector<8x128xf32>
    %566 = arith.mulf %565, %551 : vector<8x128xf32>
    %567 = arith.mulf %566, %469 : vector<8x128xf32>
    %568 = arith.addf %564, %567 : vector<8x128xf32>
    %cst_129 = arith.constant 2.500000e-01 : f32
    %569 = vector.broadcast %cst_129 : f32 to vector<8x128xf32>
    %570 = arith.mulf %569, %568 : vector<8x128xf32>
    %571 = arith.mulf %503, %490 : vector<8x128xf32>
    %cst_130 = arith.constant 2.000000e+00 : f32
    %572 = vector.broadcast %cst_130 : f32 to vector<8x128xf32>
    %573 = arith.mulf %572, %557 : vector<8x128xf32>
    %574 = arith.addf %571, %573 : vector<8x128xf32>
    %cst_131 = arith.constant 2.000000e+00 : f32
    %575 = vector.broadcast %cst_131 : f32 to vector<8x128xf32>
    %576 = arith.mulf %575, %551 : vector<8x128xf32>
    %577 = arith.mulf %576, %472 : vector<8x128xf32>
    %578 = arith.addf %574, %577 : vector<8x128xf32>
    %cst_132 = arith.constant 2.500000e-01 : f32
    %579 = vector.broadcast %cst_132 : f32 to vector<8x128xf32>
    %580 = arith.mulf %579, %578 : vector<8x128xf32>
    %581 = arith.mulf %503, %493 : vector<8x128xf32>
    %cst_133 = arith.constant 2.000000e+00 : f32
    %582 = vector.broadcast %cst_133 : f32 to vector<8x128xf32>
    %583 = arith.mulf %582, %560 : vector<8x128xf32>
    %584 = arith.addf %581, %583 : vector<8x128xf32>
    %cst_134 = arith.constant 2.000000e+00 : f32
    %585 = vector.broadcast %cst_134 : f32 to vector<8x128xf32>
    %586 = arith.mulf %585, %551 : vector<8x128xf32>
    %587 = arith.mulf %586, %475 : vector<8x128xf32>
    %588 = arith.addf %584, %587 : vector<8x128xf32>
    %cst_135 = arith.constant 2.500000e-01 : f32
    %589 = vector.broadcast %cst_135 : f32 to vector<8x128xf32>
    %590 = arith.mulf %589, %588 : vector<8x128xf32>
    %591 = arith.mulf %507, %513 : vector<8x128xf32>
    %592 = arith.mulf %510, %504 : vector<8x128xf32>
    %593 = arith.subf %591, %592 : vector<8x128xf32>
    %cst_136 = arith.constant -1.962000e+01 : f32
    %594 = vector.broadcast %cst_136 : f32 to vector<8x128xf32>
    %595 = arith.mulf %594, %593 : vector<8x128xf32>
    %596 = arith.mulf %510, %513 : vector<8x128xf32>
    %597 = arith.mulf %507, %504 : vector<8x128xf32>
    %598 = arith.addf %596, %597 : vector<8x128xf32>
    %cst_137 = arith.constant -1.962000e+01 : f32
    %599 = vector.broadcast %cst_137 : f32 to vector<8x128xf32>
    %600 = arith.mulf %599, %598 : vector<8x128xf32>
    %601 = arith.mulf %507, %507 : vector<8x128xf32>
    %602 = arith.mulf %510, %510 : vector<8x128xf32>
    %603 = arith.addf %601, %602 : vector<8x128xf32>
    %cst_138 = arith.constant 2.000000e+00 : f32
    %604 = vector.broadcast %cst_138 : f32 to vector<8x128xf32>
    %605 = arith.mulf %604, %603 : vector<8x128xf32>
    %cst_139 = arith.constant 1.000000e+00 : f32
    %606 = vector.broadcast %cst_139 : f32 to vector<8x128xf32>
    %607 = arith.subf %606, %605 : vector<8x128xf32>
    %cst_140 = arith.constant -9.810000e+00 : f32
    %608 = vector.broadcast %cst_140 : f32 to vector<8x128xf32>
    %609 = arith.mulf %608, %607 : vector<8x128xf32>
    %610 = arith.mulf %490, %484 : vector<8x128xf32>
    %611 = arith.mulf %493, %481 : vector<8x128xf32>
    %612 = arith.subf %610, %611 : vector<8x128xf32>
    %613 = arith.mulf %493, %478 : vector<8x128xf32>
    %614 = arith.mulf %487, %484 : vector<8x128xf32>
    %615 = arith.subf %613, %614 : vector<8x128xf32>
    %616 = arith.mulf %487, %481 : vector<8x128xf32>
    %617 = arith.mulf %490, %478 : vector<8x128xf32>
    %618 = arith.subf %616, %617 : vector<8x128xf32>
    %619 = arith.subf %595, %612 : vector<8x128xf32>
    %620 = arith.subf %600, %615 : vector<8x128xf32>
    %621 = arith.addf %56, %609 : vector<8x128xf32>
    %622 = arith.subf %621, %618 : vector<8x128xf32>
    %cst_141 = arith.constant 0.0156608894 : f32
    %623 = vector.broadcast %cst_141 : f32 to vector<8x128xf32>
    %624 = arith.mulf %623, %487 : vector<8x128xf32>
    %cst_142 = arith.constant 3.180370e-06 : f32
    %625 = vector.broadcast %cst_142 : f32 to vector<8x128xf32>
    %626 = arith.mulf %625, %490 : vector<8x128xf32>
    %627 = arith.addf %624, %626 : vector<8x128xf32>
    %cst_143 = arith.constant 3.180370e-06 : f32
    %628 = vector.broadcast %cst_143 : f32 to vector<8x128xf32>
    %629 = arith.mulf %628, %487 : vector<8x128xf32>
    %cst_144 = arith.constant 0.0156207802 : f32
    %630 = vector.broadcast %cst_144 : f32 to vector<8x128xf32>
    %631 = arith.mulf %630, %490 : vector<8x128xf32>
    %632 = arith.addf %629, %631 : vector<8x128xf32>
    %cst_145 = arith.constant 0.0222686809 : f32
    %633 = vector.broadcast %cst_145 : f32 to vector<8x128xf32>
    %634 = arith.mulf %633, %493 : vector<8x128xf32>
    %635 = arith.mulf %490, %634 : vector<8x128xf32>
    %636 = arith.mulf %493, %632 : vector<8x128xf32>
    %637 = arith.subf %635, %636 : vector<8x128xf32>
    %638 = arith.mulf %493, %627 : vector<8x128xf32>
    %639 = arith.mulf %487, %634 : vector<8x128xf32>
    %640 = arith.subf %638, %639 : vector<8x128xf32>
    %641 = arith.mulf %487, %632 : vector<8x128xf32>
    %642 = arith.mulf %490, %627 : vector<8x128xf32>
    %643 = arith.subf %641, %642 : vector<8x128xf32>
    %644 = arith.subf %61, %637 : vector<8x128xf32>
    %645 = arith.subf %68, %640 : vector<8x128xf32>
    %646 = arith.subf %73, %643 : vector<8x128xf32>
    %cst_146 = arith.constant 63.8533363 : f32
    %647 = vector.broadcast %cst_146 : f32 to vector<8x128xf32>
    %648 = arith.mulf %647, %644 : vector<8x128xf32>
    %cst_147 = arith.constant -0.0130004538 : f32
    %649 = vector.broadcast %cst_147 : f32 to vector<8x128xf32>
    %650 = arith.mulf %649, %645 : vector<8x128xf32>
    %651 = arith.addf %648, %650 : vector<8x128xf32>
    %cst_148 = arith.constant -0.0130004538 : f32
    %652 = vector.broadcast %cst_148 : f32 to vector<8x128xf32>
    %653 = arith.mulf %652, %644 : vector<8x128xf32>
    %cst_149 = arith.constant 64.0172882 : f32
    %654 = vector.broadcast %cst_149 : f32 to vector<8x128xf32>
    %655 = arith.mulf %654, %645 : vector<8x128xf32>
    %656 = arith.addf %653, %655 : vector<8x128xf32>
    %cst_150 = arith.constant 44.9061165 : f32
    %657 = vector.broadcast %cst_150 : f32 to vector<8x128xf32>
    %658 = arith.mulf %657, %646 : vector<8x128xf32>
    %cst_151 = arith.constant 2.000000e+00 : f32
    %659 = vector.broadcast %cst_151 : f32 to vector<8x128xf32>
    %660 = arith.mulf %659, %540 : vector<8x128xf32>
    %661 = arith.addf %433, %660 : vector<8x128xf32>
    %cst_152 = arith.constant 2.000000e+00 : f32
    %662 = vector.broadcast %cst_152 : f32 to vector<8x128xf32>
    %663 = arith.mulf %662, %543 : vector<8x128xf32>
    %664 = arith.addf %436, %663 : vector<8x128xf32>
    %cst_153 = arith.constant 2.000000e+00 : f32
    %665 = vector.broadcast %cst_153 : f32 to vector<8x128xf32>
    %666 = arith.mulf %665, %546 : vector<8x128xf32>
    %667 = arith.addf %439, %666 : vector<8x128xf32>
    %cst_154 = arith.constant 2.000000e+00 : f32
    %668 = vector.broadcast %cst_154 : f32 to vector<8x128xf32>
    %669 = arith.mulf %668, %570 : vector<8x128xf32>
    %670 = arith.addf %442, %669 : vector<8x128xf32>
    %cst_155 = arith.constant 2.000000e+00 : f32
    %671 = vector.broadcast %cst_155 : f32 to vector<8x128xf32>
    %672 = arith.mulf %671, %580 : vector<8x128xf32>
    %673 = arith.addf %445, %672 : vector<8x128xf32>
    %cst_156 = arith.constant 2.000000e+00 : f32
    %674 = vector.broadcast %cst_156 : f32 to vector<8x128xf32>
    %675 = arith.mulf %674, %590 : vector<8x128xf32>
    %676 = arith.addf %448, %675 : vector<8x128xf32>
    %cst_157 = arith.constant 2.000000e+00 : f32
    %677 = vector.broadcast %cst_157 : f32 to vector<8x128xf32>
    %678 = arith.mulf %677, %619 : vector<8x128xf32>
    %679 = arith.addf %451, %678 : vector<8x128xf32>
    %cst_158 = arith.constant 2.000000e+00 : f32
    %680 = vector.broadcast %cst_158 : f32 to vector<8x128xf32>
    %681 = arith.mulf %680, %620 : vector<8x128xf32>
    %682 = arith.addf %454, %681 : vector<8x128xf32>
    %cst_159 = arith.constant 2.000000e+00 : f32
    %683 = vector.broadcast %cst_159 : f32 to vector<8x128xf32>
    %684 = arith.mulf %683, %622 : vector<8x128xf32>
    %685 = arith.addf %457, %684 : vector<8x128xf32>
    %cst_160 = arith.constant 2.000000e+00 : f32
    %686 = vector.broadcast %cst_160 : f32 to vector<8x128xf32>
    %687 = arith.mulf %686, %651 : vector<8x128xf32>
    %688 = arith.addf %460, %687 : vector<8x128xf32>
    %cst_161 = arith.constant 2.000000e+00 : f32
    %689 = vector.broadcast %cst_161 : f32 to vector<8x128xf32>
    %690 = arith.mulf %689, %656 : vector<8x128xf32>
    %691 = arith.addf %463, %690 : vector<8x128xf32>
    %cst_162 = arith.constant 2.000000e+00 : f32
    %692 = vector.broadcast %cst_162 : f32 to vector<8x128xf32>
    %693 = arith.mulf %692, %658 : vector<8x128xf32>
    %694 = arith.addf %466, %693 : vector<8x128xf32>
    %cst_163 = arith.constant 5.000000e-02 : f32
    %695 = vector.broadcast %cst_163 : f32 to vector<8x128xf32>
    %696 = arith.mulf %695, %570 : vector<8x128xf32>
    %697 = arith.addf %13, %696 : vector<8x128xf32>
    %cst_164 = arith.constant 5.000000e-02 : f32
    %698 = vector.broadcast %cst_164 : f32 to vector<8x128xf32>
    %699 = arith.mulf %698, %580 : vector<8x128xf32>
    %700 = arith.addf %16, %699 : vector<8x128xf32>
    %cst_165 = arith.constant 5.000000e-02 : f32
    %701 = vector.broadcast %cst_165 : f32 to vector<8x128xf32>
    %702 = arith.mulf %701, %590 : vector<8x128xf32>
    %703 = arith.addf %19, %702 : vector<8x128xf32>
    %cst_166 = arith.constant 5.000000e-02 : f32
    %704 = vector.broadcast %cst_166 : f32 to vector<8x128xf32>
    %705 = arith.mulf %704, %619 : vector<8x128xf32>
    %706 = arith.addf %22, %705 : vector<8x128xf32>
    %cst_167 = arith.constant 5.000000e-02 : f32
    %707 = vector.broadcast %cst_167 : f32 to vector<8x128xf32>
    %708 = arith.mulf %707, %620 : vector<8x128xf32>
    %709 = arith.addf %25, %708 : vector<8x128xf32>
    %cst_168 = arith.constant 5.000000e-02 : f32
    %710 = vector.broadcast %cst_168 : f32 to vector<8x128xf32>
    %711 = arith.mulf %710, %622 : vector<8x128xf32>
    %712 = arith.addf %28, %711 : vector<8x128xf32>
    %cst_169 = arith.constant 5.000000e-02 : f32
    %713 = vector.broadcast %cst_169 : f32 to vector<8x128xf32>
    %714 = arith.mulf %713, %651 : vector<8x128xf32>
    %715 = arith.addf %31, %714 : vector<8x128xf32>
    %cst_170 = arith.constant 5.000000e-02 : f32
    %716 = vector.broadcast %cst_170 : f32 to vector<8x128xf32>
    %717 = arith.mulf %716, %656 : vector<8x128xf32>
    %718 = arith.addf %34, %717 : vector<8x128xf32>
    %cst_171 = arith.constant 5.000000e-02 : f32
    %719 = vector.broadcast %cst_171 : f32 to vector<8x128xf32>
    %720 = arith.mulf %719, %658 : vector<8x128xf32>
    %721 = arith.addf %37, %720 : vector<8x128xf32>
    %722 = arith.mulf %697, %697 : vector<8x128xf32>
    %723 = arith.mulf %700, %700 : vector<8x128xf32>
    %724 = arith.addf %722, %723 : vector<8x128xf32>
    %725 = arith.mulf %703, %703 : vector<8x128xf32>
    %726 = arith.addf %724, %725 : vector<8x128xf32>
    %cst_172 = arith.constant 1.000000e+00 : f32
    %727 = vector.broadcast %cst_172 : f32 to vector<8x128xf32>
    %728 = arith.addf %727, %726 : vector<8x128xf32>
    %729 = tpu.reciprocal %728 {approx = true} : vector<8x128xf32> -> vector<8x128xf32>
    %cst_173 = arith.constant 1.000000e+00 : f32
    %730 = vector.broadcast %cst_173 : f32 to vector<8x128xf32>
    %731 = arith.subf %730, %726 : vector<8x128xf32>
    %732 = arith.mulf %731, %729 : vector<8x128xf32>
    %cst_174 = arith.constant 2.000000e+00 : f32
    %733 = vector.broadcast %cst_174 : f32 to vector<8x128xf32>
    %734 = arith.mulf %733, %697 : vector<8x128xf32>
    %735 = arith.mulf %734, %729 : vector<8x128xf32>
    %cst_175 = arith.constant 2.000000e+00 : f32
    %736 = vector.broadcast %cst_175 : f32 to vector<8x128xf32>
    %737 = arith.mulf %736, %700 : vector<8x128xf32>
    %738 = arith.mulf %737, %729 : vector<8x128xf32>
    %cst_176 = arith.constant 2.000000e+00 : f32
    %739 = vector.broadcast %cst_176 : f32 to vector<8x128xf32>
    %740 = arith.mulf %739, %703 : vector<8x128xf32>
    %741 = arith.mulf %740, %729 : vector<8x128xf32>
    %742 = arith.mulf %738, %712 : vector<8x128xf32>
    %743 = arith.mulf %741, %709 : vector<8x128xf32>
    %744 = arith.subf %742, %743 : vector<8x128xf32>
    %745 = arith.mulf %741, %706 : vector<8x128xf32>
    %746 = arith.mulf %735, %712 : vector<8x128xf32>
    %747 = arith.subf %745, %746 : vector<8x128xf32>
    %748 = arith.mulf %735, %709 : vector<8x128xf32>
    %749 = arith.mulf %738, %706 : vector<8x128xf32>
    %750 = arith.subf %748, %749 : vector<8x128xf32>
    %751 = arith.mulf %732, %706 : vector<8x128xf32>
    %752 = arith.addf %751, %744 : vector<8x128xf32>
    %753 = arith.mulf %732, %709 : vector<8x128xf32>
    %754 = arith.addf %753, %747 : vector<8x128xf32>
    %755 = arith.mulf %732, %712 : vector<8x128xf32>
    %756 = arith.addf %755, %750 : vector<8x128xf32>
    %757 = arith.mulf %738, %756 : vector<8x128xf32>
    %758 = arith.mulf %741, %754 : vector<8x128xf32>
    %759 = arith.subf %757, %758 : vector<8x128xf32>
    %760 = arith.mulf %741, %752 : vector<8x128xf32>
    %761 = arith.mulf %735, %756 : vector<8x128xf32>
    %762 = arith.subf %760, %761 : vector<8x128xf32>
    %763 = arith.mulf %735, %754 : vector<8x128xf32>
    %764 = arith.mulf %738, %752 : vector<8x128xf32>
    %765 = arith.subf %763, %764 : vector<8x128xf32>
    %cst_177 = arith.constant 2.000000e+00 : f32
    %766 = vector.broadcast %cst_177 : f32 to vector<8x128xf32>
    %767 = arith.mulf %766, %759 : vector<8x128xf32>
    %768 = arith.addf %706, %767 : vector<8x128xf32>
    %cst_178 = arith.constant 2.000000e+00 : f32
    %769 = vector.broadcast %cst_178 : f32 to vector<8x128xf32>
    %770 = arith.mulf %769, %762 : vector<8x128xf32>
    %771 = arith.addf %709, %770 : vector<8x128xf32>
    %cst_179 = arith.constant 2.000000e+00 : f32
    %772 = vector.broadcast %cst_179 : f32 to vector<8x128xf32>
    %773 = arith.mulf %772, %765 : vector<8x128xf32>
    %774 = arith.addf %712, %773 : vector<8x128xf32>
    %775 = arith.mulf %697, %715 : vector<8x128xf32>
    %776 = arith.mulf %700, %718 : vector<8x128xf32>
    %777 = arith.addf %775, %776 : vector<8x128xf32>
    %778 = arith.mulf %703, %721 : vector<8x128xf32>
    %779 = arith.addf %777, %778 : vector<8x128xf32>
    %780 = arith.mulf %700, %721 : vector<8x128xf32>
    %781 = arith.mulf %703, %718 : vector<8x128xf32>
    %782 = arith.subf %780, %781 : vector<8x128xf32>
    %783 = arith.mulf %703, %715 : vector<8x128xf32>
    %784 = arith.mulf %697, %721 : vector<8x128xf32>
    %785 = arith.subf %783, %784 : vector<8x128xf32>
    %786 = arith.mulf %697, %718 : vector<8x128xf32>
    %787 = arith.mulf %700, %715 : vector<8x128xf32>
    %788 = arith.subf %786, %787 : vector<8x128xf32>
    %789 = arith.mulf %731, %715 : vector<8x128xf32>
    %cst_180 = arith.constant 2.000000e+00 : f32
    %790 = vector.broadcast %cst_180 : f32 to vector<8x128xf32>
    %791 = arith.mulf %790, %782 : vector<8x128xf32>
    %792 = arith.addf %789, %791 : vector<8x128xf32>
    %cst_181 = arith.constant 2.000000e+00 : f32
    %793 = vector.broadcast %cst_181 : f32 to vector<8x128xf32>
    %794 = arith.mulf %793, %779 : vector<8x128xf32>
    %795 = arith.mulf %794, %697 : vector<8x128xf32>
    %796 = arith.addf %792, %795 : vector<8x128xf32>
    %cst_182 = arith.constant 2.500000e-01 : f32
    %797 = vector.broadcast %cst_182 : f32 to vector<8x128xf32>
    %798 = arith.mulf %797, %796 : vector<8x128xf32>
    %799 = arith.mulf %731, %718 : vector<8x128xf32>
    %cst_183 = arith.constant 2.000000e+00 : f32
    %800 = vector.broadcast %cst_183 : f32 to vector<8x128xf32>
    %801 = arith.mulf %800, %785 : vector<8x128xf32>
    %802 = arith.addf %799, %801 : vector<8x128xf32>
    %cst_184 = arith.constant 2.000000e+00 : f32
    %803 = vector.broadcast %cst_184 : f32 to vector<8x128xf32>
    %804 = arith.mulf %803, %779 : vector<8x128xf32>
    %805 = arith.mulf %804, %700 : vector<8x128xf32>
    %806 = arith.addf %802, %805 : vector<8x128xf32>
    %cst_185 = arith.constant 2.500000e-01 : f32
    %807 = vector.broadcast %cst_185 : f32 to vector<8x128xf32>
    %808 = arith.mulf %807, %806 : vector<8x128xf32>
    %809 = arith.mulf %731, %721 : vector<8x128xf32>
    %cst_186 = arith.constant 2.000000e+00 : f32
    %810 = vector.broadcast %cst_186 : f32 to vector<8x128xf32>
    %811 = arith.mulf %810, %788 : vector<8x128xf32>
    %812 = arith.addf %809, %811 : vector<8x128xf32>
    %cst_187 = arith.constant 2.000000e+00 : f32
    %813 = vector.broadcast %cst_187 : f32 to vector<8x128xf32>
    %814 = arith.mulf %813, %779 : vector<8x128xf32>
    %815 = arith.mulf %814, %703 : vector<8x128xf32>
    %816 = arith.addf %812, %815 : vector<8x128xf32>
    %cst_188 = arith.constant 2.500000e-01 : f32
    %817 = vector.broadcast %cst_188 : f32 to vector<8x128xf32>
    %818 = arith.mulf %817, %816 : vector<8x128xf32>
    %819 = arith.mulf %735, %741 : vector<8x128xf32>
    %820 = arith.mulf %738, %732 : vector<8x128xf32>
    %821 = arith.subf %819, %820 : vector<8x128xf32>
    %cst_189 = arith.constant -1.962000e+01 : f32
    %822 = vector.broadcast %cst_189 : f32 to vector<8x128xf32>
    %823 = arith.mulf %822, %821 : vector<8x128xf32>
    %824 = arith.mulf %738, %741 : vector<8x128xf32>
    %825 = arith.mulf %735, %732 : vector<8x128xf32>
    %826 = arith.addf %824, %825 : vector<8x128xf32>
    %cst_190 = arith.constant -1.962000e+01 : f32
    %827 = vector.broadcast %cst_190 : f32 to vector<8x128xf32>
    %828 = arith.mulf %827, %826 : vector<8x128xf32>
    %829 = arith.mulf %735, %735 : vector<8x128xf32>
    %830 = arith.mulf %738, %738 : vector<8x128xf32>
    %831 = arith.addf %829, %830 : vector<8x128xf32>
    %cst_191 = arith.constant 2.000000e+00 : f32
    %832 = vector.broadcast %cst_191 : f32 to vector<8x128xf32>
    %833 = arith.mulf %832, %831 : vector<8x128xf32>
    %cst_192 = arith.constant 1.000000e+00 : f32
    %834 = vector.broadcast %cst_192 : f32 to vector<8x128xf32>
    %835 = arith.subf %834, %833 : vector<8x128xf32>
    %cst_193 = arith.constant -9.810000e+00 : f32
    %836 = vector.broadcast %cst_193 : f32 to vector<8x128xf32>
    %837 = arith.mulf %836, %835 : vector<8x128xf32>
    %838 = arith.mulf %718, %712 : vector<8x128xf32>
    %839 = arith.mulf %721, %709 : vector<8x128xf32>
    %840 = arith.subf %838, %839 : vector<8x128xf32>
    %841 = arith.mulf %721, %706 : vector<8x128xf32>
    %842 = arith.mulf %715, %712 : vector<8x128xf32>
    %843 = arith.subf %841, %842 : vector<8x128xf32>
    %844 = arith.mulf %715, %709 : vector<8x128xf32>
    %845 = arith.mulf %718, %706 : vector<8x128xf32>
    %846 = arith.subf %844, %845 : vector<8x128xf32>
    %847 = arith.subf %823, %840 : vector<8x128xf32>
    %848 = arith.subf %828, %843 : vector<8x128xf32>
    %849 = arith.addf %56, %837 : vector<8x128xf32>
    %850 = arith.subf %849, %846 : vector<8x128xf32>
    %cst_194 = arith.constant 0.0156608894 : f32
    %851 = vector.broadcast %cst_194 : f32 to vector<8x128xf32>
    %852 = arith.mulf %851, %715 : vector<8x128xf32>
    %cst_195 = arith.constant 3.180370e-06 : f32
    %853 = vector.broadcast %cst_195 : f32 to vector<8x128xf32>
    %854 = arith.mulf %853, %718 : vector<8x128xf32>
    %855 = arith.addf %852, %854 : vector<8x128xf32>
    %cst_196 = arith.constant 3.180370e-06 : f32
    %856 = vector.broadcast %cst_196 : f32 to vector<8x128xf32>
    %857 = arith.mulf %856, %715 : vector<8x128xf32>
    %cst_197 = arith.constant 0.0156207802 : f32
    %858 = vector.broadcast %cst_197 : f32 to vector<8x128xf32>
    %859 = arith.mulf %858, %718 : vector<8x128xf32>
    %860 = arith.addf %857, %859 : vector<8x128xf32>
    %cst_198 = arith.constant 0.0222686809 : f32
    %861 = vector.broadcast %cst_198 : f32 to vector<8x128xf32>
    %862 = arith.mulf %861, %721 : vector<8x128xf32>
    %863 = arith.mulf %718, %862 : vector<8x128xf32>
    %864 = arith.mulf %721, %860 : vector<8x128xf32>
    %865 = arith.subf %863, %864 : vector<8x128xf32>
    %866 = arith.mulf %721, %855 : vector<8x128xf32>
    %867 = arith.mulf %715, %862 : vector<8x128xf32>
    %868 = arith.subf %866, %867 : vector<8x128xf32>
    %869 = arith.mulf %715, %860 : vector<8x128xf32>
    %870 = arith.mulf %718, %855 : vector<8x128xf32>
    %871 = arith.subf %869, %870 : vector<8x128xf32>
    %872 = arith.subf %61, %865 : vector<8x128xf32>
    %873 = arith.subf %68, %868 : vector<8x128xf32>
    %874 = arith.subf %73, %871 : vector<8x128xf32>
    %cst_199 = arith.constant 63.8533363 : f32
    %875 = vector.broadcast %cst_199 : f32 to vector<8x128xf32>
    %876 = arith.mulf %875, %872 : vector<8x128xf32>
    %cst_200 = arith.constant -0.0130004538 : f32
    %877 = vector.broadcast %cst_200 : f32 to vector<8x128xf32>
    %878 = arith.mulf %877, %873 : vector<8x128xf32>
    %879 = arith.addf %876, %878 : vector<8x128xf32>
    %cst_201 = arith.constant -0.0130004538 : f32
    %880 = vector.broadcast %cst_201 : f32 to vector<8x128xf32>
    %881 = arith.mulf %880, %872 : vector<8x128xf32>
    %cst_202 = arith.constant 64.0172882 : f32
    %882 = vector.broadcast %cst_202 : f32 to vector<8x128xf32>
    %883 = arith.mulf %882, %873 : vector<8x128xf32>
    %884 = arith.addf %881, %883 : vector<8x128xf32>
    %cst_203 = arith.constant 44.9061165 : f32
    %885 = vector.broadcast %cst_203 : f32 to vector<8x128xf32>
    %886 = arith.mulf %885, %874 : vector<8x128xf32>
    %887 = arith.addf %661, %768 : vector<8x128xf32>
    %cst_204 = arith.constant 0.00833333377 : f32
    %888 = vector.broadcast %cst_204 : f32 to vector<8x128xf32>
    %889 = arith.mulf %888, %887 : vector<8x128xf32>
    %890 = arith.addf %4, %889 : vector<8x128xf32>
    %891 = arith.addf %664, %771 : vector<8x128xf32>
    %cst_205 = arith.constant 0.00833333377 : f32
    %892 = vector.broadcast %cst_205 : f32 to vector<8x128xf32>
    %893 = arith.mulf %892, %891 : vector<8x128xf32>
    %894 = arith.addf %7, %893 : vector<8x128xf32>
    %895 = arith.addf %667, %774 : vector<8x128xf32>
    %cst_206 = arith.constant 0.00833333377 : f32
    %896 = vector.broadcast %cst_206 : f32 to vector<8x128xf32>
    %897 = arith.mulf %896, %895 : vector<8x128xf32>
    %898 = arith.addf %10, %897 : vector<8x128xf32>
    %899 = arith.addf %670, %798 : vector<8x128xf32>
    %cst_207 = arith.constant 0.00833333377 : f32
    %900 = vector.broadcast %cst_207 : f32 to vector<8x128xf32>
    %901 = arith.mulf %900, %899 : vector<8x128xf32>
    %902 = arith.addf %13, %901 : vector<8x128xf32>
    %903 = arith.addf %673, %808 : vector<8x128xf32>
    %cst_208 = arith.constant 0.00833333377 : f32
    %904 = vector.broadcast %cst_208 : f32 to vector<8x128xf32>
    %905 = arith.mulf %904, %903 : vector<8x128xf32>
    %906 = arith.addf %16, %905 : vector<8x128xf32>
    %907 = arith.addf %676, %818 : vector<8x128xf32>
    %cst_209 = arith.constant 0.00833333377 : f32
    %908 = vector.broadcast %cst_209 : f32 to vector<8x128xf32>
    %909 = arith.mulf %908, %907 : vector<8x128xf32>
    %910 = arith.addf %19, %909 : vector<8x128xf32>
    %911 = arith.addf %679, %847 : vector<8x128xf32>
    %cst_210 = arith.constant 0.00833333377 : f32
    %912 = vector.broadcast %cst_210 : f32 to vector<8x128xf32>
    %913 = arith.mulf %912, %911 : vector<8x128xf32>
    %914 = arith.addf %22, %913 : vector<8x128xf32>
    %915 = arith.addf %682, %848 : vector<8x128xf32>
    %cst_211 = arith.constant 0.00833333377 : f32
    %916 = vector.broadcast %cst_211 : f32 to vector<8x128xf32>
    %917 = arith.mulf %916, %915 : vector<8x128xf32>
    %918 = arith.addf %25, %917 : vector<8x128xf32>
    %919 = arith.addf %685, %850 : vector<8x128xf32>
    %cst_212 = arith.constant 0.00833333377 : f32
    %920 = vector.broadcast %cst_212 : f32 to vector<8x128xf32>
    %921 = arith.mulf %920, %919 : vector<8x128xf32>
    %922 = arith.addf %28, %921 : vector<8x128xf32>
    %923 = arith.addf %688, %879 : vector<8x128xf32>
    %cst_213 = arith.constant 0.00833333377 : f32
    %924 = vector.broadcast %cst_213 : f32 to vector<8x128xf32>
    %925 = arith.mulf %924, %923 : vector<8x128xf32>
    %926 = arith.addf %31, %925 : vector<8x128xf32>
    %927 = arith.addf %691, %884 : vector<8x128xf32>
    %cst_214 = arith.constant 0.00833333377 : f32
    %928 = vector.broadcast %cst_214 : f32 to vector<8x128xf32>
    %929 = arith.mulf %928, %927 : vector<8x128xf32>
    %930 = arith.addf %34, %929 : vector<8x128xf32>
    %931 = arith.addf %694, %886 : vector<8x128xf32>
    %cst_215 = arith.constant 0.00833333377 : f32
    %932 = vector.broadcast %cst_215 : f32 to vector<8x128xf32>
    %933 = arith.mulf %932, %931 : vector<8x128xf32>
    %934 = arith.addf %37, %933 : vector<8x128xf32>
    %c0_216 = arith.constant 0 : index
    %935 = arith.index_cast %1 : i32 to index
    %c0_217 = arith.constant 0 : index
    %936 = vector.load %arg3[%c0_216, %935, %c0_217] : memref<12x8x128xf32, #tpu.memory_space<vmem>>, vector<1x8x128xf32>
    %937 = vector.shape_cast %936 : vector<1x8x128xf32> to vector<8x128xf32>
    %938 = vector.shape_cast %890 : vector<8x128xf32> to vector<1x8x128xf32>
    tpu.vector_store %arg3[%c0_216, %935, %c0_217], %938 {strides = array<i32>} : memref<12x8x128xf32, #tpu.memory_space<vmem>>, vector<1x8x128xf32>,
    %c1_218 = arith.constant 1 : index
    %939 = arith.index_cast %1 : i32 to index
    %c0_219 = arith.constant 0 : index
    %940 = vector.load %arg3[%c1_218, %939, %c0_219] : memref<12x8x128xf32, #tpu.memory_space<vmem>>, vector<1x8x128xf32>
    %941 = vector.shape_cast %940 : vector<1x8x128xf32> to vector<8x128xf32>
    %942 = vector.shape_cast %894 : vector<8x128xf32> to vector<1x8x128xf32>
    tpu.vector_store %arg3[%c1_218, %939, %c0_219], %942 {strides = array<i32>} : memref<12x8x128xf32, #tpu.memory_space<vmem>>, vector<1x8x128xf32>,
    %c2_220 = arith.constant 2 : index
    %943 = arith.index_cast %1 : i32 to index
    %c0_221 = arith.constant 0 : index
    %944 = vector.load %arg3[%c2_220, %943, %c0_221] : memref<12x8x128xf32, #tpu.memory_space<vmem>>, vector<1x8x128xf32>
    %945 = vector.shape_cast %944 : vector<1x8x128xf32> to vector<8x128xf32>
    %946 = vector.shape_cast %898 : vector<8x128xf32> to vector<1x8x128xf32>
    tpu.vector_store %arg3[%c2_220, %943, %c0_221], %946 {strides = array<i32>} : memref<12x8x128xf32, #tpu.memory_space<vmem>>, vector<1x8x128xf32>,
    %c3_222 = arith.constant 3 : index
    %947 = arith.index_cast %1 : i32 to index
    %c0_223 = arith.constant 0 : index
    %948 = vector.load %arg3[%c3_222, %947, %c0_223] : memref<12x8x128xf32, #tpu.memory_space<vmem>>, vector<1x8x128xf32>
    %949 = vector.shape_cast %948 : vector<1x8x128xf32> to vector<8x128xf32>
    %950 = vector.shape_cast %902 : vector<8x128xf32> to vector<1x8x128xf32>
    tpu.vector_store %arg3[%c3_222, %947, %c0_223], %950 {strides = array<i32>} : memref<12x8x128xf32, #tpu.memory_space<vmem>>, vector<1x8x128xf32>,
    %c4_224 = arith.constant 4 : index
    %951 = arith.index_cast %1 : i32 to index
    %c0_225 = arith.constant 0 : index
    %952 = vector.load %arg3[%c4_224, %951, %c0_225] : memref<12x8x128xf32, #tpu.memory_space<vmem>>, vector<1x8x128xf32>
    %953 = vector.shape_cast %952 : vector<1x8x128xf32> to vector<8x128xf32>
    %954 = vector.shape_cast %906 : vector<8x128xf32> to vector<1x8x128xf32>
    tpu.vector_store %arg3[%c4_224, %951, %c0_225], %954 {strides = array<i32>} : memref<12x8x128xf32, #tpu.memory_space<vmem>>, vector<1x8x128xf32>,
    %c5_226 = arith.constant 5 : index
    %955 = arith.index_cast %1 : i32 to index
    %c0_227 = arith.constant 0 : index
    %956 = vector.load %arg3[%c5_226, %955, %c0_227] : memref<12x8x128xf32, #tpu.memory_space<vmem>>, vector<1x8x128xf32>
    %957 = vector.shape_cast %956 : vector<1x8x128xf32> to vector<8x128xf32>
    %958 = vector.shape_cast %910 : vector<8x128xf32> to vector<1x8x128xf32>
    tpu.vector_store %arg3[%c5_226, %955, %c0_227], %958 {strides = array<i32>} : memref<12x8x128xf32, #tpu.memory_space<vmem>>, vector<1x8x128xf32>,
    %c6_228 = arith.constant 6 : index
    %959 = arith.index_cast %1 : i32 to index
    %c0_229 = arith.constant 0 : index
    %960 = vector.load %arg3[%c6_228, %959, %c0_229] : memref<12x8x128xf32, #tpu.memory_space<vmem>>, vector<1x8x128xf32>
    %961 = vector.shape_cast %960 : vector<1x8x128xf32> to vector<8x128xf32>
    %962 = vector.shape_cast %914 : vector<8x128xf32> to vector<1x8x128xf32>
    tpu.vector_store %arg3[%c6_228, %959, %c0_229], %962 {strides = array<i32>} : memref<12x8x128xf32, #tpu.memory_space<vmem>>, vector<1x8x128xf32>,
    %c7_230 = arith.constant 7 : index
    %963 = arith.index_cast %1 : i32 to index
    %c0_231 = arith.constant 0 : index
    %964 = vector.load %arg3[%c7_230, %963, %c0_231] : memref<12x8x128xf32, #tpu.memory_space<vmem>>, vector<1x8x128xf32>
    %965 = vector.shape_cast %964 : vector<1x8x128xf32> to vector<8x128xf32>
    %966 = vector.shape_cast %918 : vector<8x128xf32> to vector<1x8x128xf32>
    tpu.vector_store %arg3[%c7_230, %963, %c0_231], %966 {strides = array<i32>} : memref<12x8x128xf32, #tpu.memory_space<vmem>>, vector<1x8x128xf32>,
    %c8_232 = arith.constant 8 : index
    %967 = arith.index_cast %1 : i32 to index
    %c0_233 = arith.constant 0 : index
    %968 = vector.load %arg3[%c8_232, %967, %c0_233] : memref<12x8x128xf32, #tpu.memory_space<vmem>>, vector<1x8x128xf32>
    %969 = vector.shape_cast %968 : vector<1x8x128xf32> to vector<8x128xf32>
    %970 = vector.shape_cast %922 : vector<8x128xf32> to vector<1x8x128xf32>
    tpu.vector_store %arg3[%c8_232, %967, %c0_233], %970 {strides = array<i32>} : memref<12x8x128xf32, #tpu.memory_space<vmem>>, vector<1x8x128xf32>,
    %c9_234 = arith.constant 9 : index
    %971 = arith.index_cast %1 : i32 to index
    %c0_235 = arith.constant 0 : index
    %972 = vector.load %arg3[%c9_234, %971, %c0_235] : memref<12x8x128xf32, #tpu.memory_space<vmem>>, vector<1x8x128xf32>
    %973 = vector.shape_cast %972 : vector<1x8x128xf32> to vector<8x128xf32>
    %974 = vector.shape_cast %926 : vector<8x128xf32> to vector<1x8x128xf32>
    tpu.vector_store %arg3[%c9_234, %971, %c0_235], %974 {strides = array<i32>} : memref<12x8x128xf32, #tpu.memory_space<vmem>>, vector<1x8x128xf32>,
    %c10_236 = arith.constant 10 : index
    %975 = arith.index_cast %1 : i32 to index
    %c0_237 = arith.constant 0 : index
    %976 = vector.load %arg3[%c10_236, %975, %c0_237] : memref<12x8x128xf32, #tpu.memory_space<vmem>>, vector<1x8x128xf32>
    %977 = vector.shape_cast %976 : vector<1x8x128xf32> to vector<8x128xf32>
    %978 = vector.shape_cast %930 : vector<8x128xf32> to vector<1x8x128xf32>
    tpu.vector_store %arg3[%c10_236, %975, %c0_237], %978 {strides = array<i32>} : memref<12x8x128xf32, #tpu.memory_space<vmem>>, vector<1x8x128xf32>,
    %c11_238 = arith.constant 11 : index
    %979 = arith.index_cast %1 : i32 to index
    %c0_239 = arith.constant 0 : index
    %980 = vector.load %arg3[%c11_238, %979, %c0_239] : memref<12x8x128xf32, #tpu.memory_space<vmem>>, vector<1x8x128xf32>
    %981 = vector.shape_cast %980 : vector<1x8x128xf32> to vector<8x128xf32>
    %982 = vector.shape_cast %934 : vector<8x128xf32> to vector<1x8x128xf32>
    tpu.vector_store %arg3[%c11_238, %979, %c0_239], %982 {strides = array<i32>} : memref<12x8x128xf32, #tpu.memory_space<vmem>>, vector<1x8x128xf32>,
    %c1_i32 = arith.constant 1 : i32
    return
  }
  func.func @transform_0(%arg0: i32) -> (i32, i32, i32) {
    %c0_i32 = arith.constant 0 : i32
    %c0_i32_0 = arith.constant 0 : i32
    %c0_i32_1 = arith.constant 0 : i32
    return %c0_i32, %arg0, %c0_i32_0 : i32, i32, i32
  }
  func.func @transform_1(%arg0: i32) -> (i32, i32, i32) {
    %c0_i32 = arith.constant 0 : i32
    %c0_i32_0 = arith.constant 0 : i32
    %c0_i32_1 = arith.constant 0 : i32
    return %c0_i32, %arg0, %c0_i32_0 : i32, i32, i32
  }
  func.func @transform_2(%arg0: i32) -> (i32, i32, i32) {
    %c0_i32 = arith.constant 0 : i32
    %c0_i32_0 = arith.constant 0 : i32
    %c0_i32_1 = arith.constant 0 : i32
    return %c0_i32, %arg0, %c0_i32_0 : i32, i32, i32
  }
}

</mosaic_0001>

<llo_original>
// kernel: tpu_custom_call.1
$region0: #{tpu_custom_call.1}
  #allocation0 [shape = 'u32[]', space=smem, size = 0x4, offset = 0x4, fixed_abs, tag = 'smem constant byte address 0x4 - core index']
  #allocation1 [shape = 'u32[144,128]{1,0:T(1,128)}', space=vmem, size = 0x12000, scoped, tag = 'internal scratch']
  %s0 = inlined_call_operand.hbm [shape: f32[12,8,128], index: 0, kind: input, shape index: {}]
  %s1 = inlined_call_operand.hbm [shape: f32[4,8,128], index: 1, kind: input, shape index: {}]
  %s2 = inlined_call_operand.hbm [shape: f32[12,8,128], index: 2, kind: output, shape index: {}]
  %s3 = sld [smem:[#allocation0]]
  $region26: #{tpu_custom_call.1} parent=0
    _
  %s5 = ssub.s32 1, %s3
  %s6 = scalar_select 0, %s5, %s3
  $region1: #{tpu_custom_call.1} parent=0
    #allocation2 [shape = 'u8[49152]{0}', space=vmem, size = 0xc000, scoped, tag = 'input window, operand 0, single buffered']
    #allocation3 [shape = 's32[1]{0}', space=sflag, size = 0x4, scoped, tag = 'scoped memory for tpu_custom_call.1']
    #allocation4 [shape = 's32[1]{0}', space=sflag, size = 0x4, scoped, tag = 'scoped memory for tpu_custom_call.1']
    #allocation5 [shape = 'u8[16384]{0}', space=vmem, size = 0x4000, scoped, tag = 'input window, operand 1, single buffered']
    #allocation6 [shape = 's32[1]{0}', space=sflag, size = 0x4, scoped, tag = 'scoped memory for tpu_custom_call.1']
    #allocation7 [shape = 'u8[49152]{0}', space=vmem, size = 0xc000, scoped, tag = 'output window, operand 0, single buffered']
    %7 = vsyncpa [#allocation3], 0
    %8 = vsyncpa [#allocation6], 0
    %9 = vsyncpa [#allocation4], 0
    // Predicated region
    $region2: #{tpu_custom_call.1} parent=1 // pred_check
      _
    $region3: #{tpu_custom_call.1} parent=1 // pred_check_branch
      %11 = sbr.rel (0) target = $region5
    $region4: #{tpu_custom_call.1} parent=1 // pred_region
      %s13 = ssub.s32 1536, 1536
      %14 = vsyncadd [#allocation3], %s13
      %s15 = sshll.u32 [#allocation2], 4
      %s16 = int_to_ptr.vmem [resolvable:$true] %s15
      %21 = dma.hbm_to_vmem [thread:$0]  %s0, 1536, %s16, [#allocation3], 128, 128, 8
    $region5: #{tpu_custom_call.1} parent=1 // pred_fallthru
      _
    // Predicated region
    $region6: #{tpu_custom_call.1} parent=1 // pred_check
      _
    $region7: #{tpu_custom_call.1} parent=1 // pred_check_branch
      %23 = sbr.rel (0) target = $region9
    $region8: #{tpu_custom_call.1} parent=1 // pred_region
      %s25 = ssub.s32 512, 512
      %26 = vsyncadd [#allocation6], %s25
      %s27 = sshll.u32 [#allocation5], 4
      %s28 = int_to_ptr.vmem [resolvable:$true] %s27
      %33 = dma.hbm_to_vmem [thread:$0]  %s1, 512, %s28, [#allocation6], 128, 128, 8
    $region9: #{tpu_custom_call.1} parent=1 // pred_fallthru
      _
    // Predicated region
    $region10: #{tpu_custom_call.1} parent=1 // pred_check
      _
    $region11: #{tpu_custom_call.1} parent=1 // pred_check_branch
      %35 = sbr.rel (0) target = $region13
    $region12: #{tpu_custom_call.1} parent=1 // pred_region
      %36 = dma.done [#allocation3], 1536
    $region13: #{tpu_custom_call.1} parent=1 // pred_fallthru
      _
    // Predicated region
    $region14: #{tpu_custom_call.1} parent=1 // pred_check
      _
    $region15: #{tpu_custom_call.1} parent=1 // pred_check_branch
      %38 = sbr.rel (0) target = $region17
    $region16: #{tpu_custom_call.1} parent=1 // pred_region
      %39 = dma.done [#allocation6], 512
    $region17: #{tpu_custom_call.1} parent=1 // pred_fallthru
      _
    %v40 = vld [vmem:[#allocation2] sm:$0xff]
    %s41 = sadd.s32 0, 8
    %s42 = scalar_lea.vmem [#allocation2], %s41
    %v43 = vld [vmem:[%s42] sm:$0xff]
    %s44 = sadd.s32 0, 16
    %s45 = scalar_lea.vmem [#allocation2], %s44
    %v46 = vld [vmem:[%s45] sm:$0xff]
    %s47 = sadd.s32 0, 24
    %s48 = scalar_lea.vmem [#allocation2], %s47
    %v49 = vld [vmem:[%s48] sm:$0xff]
    %s50 = sadd.s32 0, 32
    %s51 = scalar_lea.vmem [#allocation2], %s50
    %v52 = vld [vmem:[%s51] sm:$0xff]
    %s53 = sadd.s32 0, 40
    %s54 = scalar_lea.vmem [#allocation2], %s53
    %v55 = vld [vmem:[%s54] sm:$0xff]
    %s56 = sadd.s32 0, 48
    %s57 = scalar_lea.vmem [#allocation2], %s56
    %v58 = vld [vmem:[%s57] sm:$0xff]
    %s59 = sadd.s32 0, 56
    %s60 = scalar_lea.vmem [#allocation2], %s59
    %v61 = vld [vmem:[%s60] sm:$0xff]
    %s62 = sadd.s32 0, 64
    %s63 = scalar_lea.vmem [#allocation2], %s62
    %v64 = vld [vmem:[%s63] sm:$0xff]
    %s65 = sadd.s32 0, 72
    %s66 = scalar_lea.vmem [#allocation2], %s65
    %v67 = vld [vmem:[%s66] sm:$0xff]
    %s68 = sadd.s32 0, 80
    %s69 = scalar_lea.vmem [#allocation2], %s68
    %v70 = vld [vmem:[%s69] sm:$0xff]
    %s71 = sadd.s32 0, 88
    %s72 = scalar_lea.vmem [#allocation2], %s71
    %v73 = vld [vmem:[%s72] sm:$0xff]
    %v74 = vld [vmem:[#allocation5] sm:$0xff]
    %s75 = scalar_lea.vmem [#allocation5], %s41
    %v76 = vld [vmem:[%s75] sm:$0xff]
    %s77 = scalar_lea.vmem [#allocation5], %s44
    %v78 = vld [vmem:[%s77] sm:$0xff]
    %s79 = scalar_lea.vmem [#allocation5], %s47
    %v80 = vld [vmem:[%s79] sm:$0xff]
    %v81 = vadd.f32 %v74, %v76
    %v82 = vadd.f32 %v81, %v78
    %v83 = vadd.f32 %v82, %v80
    %v84 = vmul.f32 %v83, 1.220505
    %v85 = vadd.f32 %v84, -60.97152
    %v86 = vsub.f32 %v74, %v76
    %v87 = vsub.f32 %v86, %v78
    %v88 = vadd.f32 %v87, %v80
    %v89 = vmul.f32 %v88, 0.48329532
    %v90 = vsub.f32 0.0, %v74
    %v91 = vsub.f32 %v90, %v76
    %v92 = vadd.f32 %v91, %v78
    %v93 = vadd.f32 %v92, %v80
    %v94 = vmul.f32 %v93, 0.48329532
    %v95 = vadd.f32 %v86, %v78
    %v96 = vsub.f32 %v95, %v80
    %v97 = vmul.f32 %v96, 0.029958
    %v98 = vmul.f32 %v49, %v49
    %v99 = vmul.f32 %v52, %v52
    %v100 = vadd.f32 %v98, %v99
    %v101 = vmul.f32 %v55, %v55
    %v102 = vadd.f32 %v100, %v101
    %v103 = vadd.f32 %v102, 1.0
    %v104 = vrcp.pop %v103
    %v105 = vsub.f32 1.0, %v102
    %v106 = vmul.f32 %v105, %v104
    %v107 = vmul.f32 %v49, 2.0
    %v108 = vmul.f32 %v107, %v104
    %v109 = vmul.f32 %v52, 2.0
    %v110 = vmul.f32 %v109, %v104
    %v111 = vmul.f32 %v55, 2.0
    %v112 = vmul.f32 %v111, %v104
    %v113 = vmul.f32 %v110, %v64
    %v114 = vmul.f32 %v112, %v61
    %v115 = vsub.f32 %v113, %v114
    %v116 = vmul.f32 %v112, %v58
    %v117 = vmul.f32 %v108, %v64
    %v118 = vsub.f32 %v116, %v117
    %v119 = vmul.f32 %v108, %v61
    %v120 = vmul.f32 %v110, %v58
    %v121 = vsub.f32 %v119, %v120
    %v122 = vmul.f32 %v106, %v58
    %v123 = vadd.f32 %v122, %v115
    %v124 = vmul.f32 %v106, %v61
    %v125 = vadd.f32 %v124, %v118
    %v126 = vmul.f32 %v106, %v64
    %v127 = vadd.f32 %v126, %v121
    %v128 = vmul.f32 %v110, %v127
    %v129 = vmul.f32 %v112, %v125
    %v130 = vsub.f32 %v128, %v129
    %v131 = vmul.f32 %v112, %v123
    %v132 = vmul.f32 %v108, %v127
    %v133 = vsub.f32 %v131, %v132
    %v134 = vmul.f32 %v108, %v125
    %v135 = vmul.f32 %v110, %v123
    %v136 = vsub.f32 %v134, %v135
    %v137 = vmul.f32 %v130, 2.0
    %v138 = vadd.f32 %v58, %v137
    %v139 = vmul.f32 %v133, 2.0
    %v140 = vadd.f32 %v61, %v139
    %v141 = vmul.f32 %v136, 2.0
    %v142 = vadd.f32 %v64, %v141
    %v143 = vmul.f32 %v49, %v67
    %v144 = vmul.f32 %v52, %v70
    %v145 = vadd.f32 %v143, %v144
    %v146 = vmul.f32 %v55, %v73
    %v147 = vadd.f32 %v145, %v146
    %v148 = vmul.f32 %v52, %v73
    %v149 = vmul.f32 %v55, %v70
    %v150 = vsub.f32 %v148, %v149
    %v151 = vmul.f32 %v55, %v67
    %v152 = vmul.f32 %v49, %v73
    %v153 = vsub.f32 %v151, %v152
    %v154 = vmul.f32 %v49, %v70
    %v155 = vmul.f32 %v52, %v67
    %v156 = vsub.f32 %v154, %v155
    %v157 = vmul.f32 %v105, %v67
    %v158 = vmul.f32 %v150, 2.0
    %v159 = vadd.f32 %v157, %v158
    %v160 = vmul.f32 %v147, 2.0
    %v161 = vmul.f32 %v160, %v49
    %v162 = vadd.f32 %v159, %v161
    %v163 = vmul.f32 %v162, 0.25
    %v164 = vmul.f32 %v105, %v70
    %v165 = vmul.f32 %v153, 2.0
    %v166 = vadd.f32 %v164, %v165
    %v167 = vmul.f32 %v160, %v52
    %v168 = vadd.f32 %v166, %v167
    %v169 = vmul.f32 %v168, 0.25
    %v170 = vmul.f32 %v105, %v73
    %v171 = vmul.f32 %v156, 2.0
    %v172 = vadd.f32 %v170, %v171
    %v173 = vmul.f32 %v160, %v55
    %v174 = vadd.f32 %v172, %v173
    %v175 = vmul.f32 %v174, 0.25
    %v176 = vmul.f32 %v108, %v112
    %v177 = vmul.f32 %v110, %v106
    %v178 = vsub.f32 %v176, %v177
    %v179 = vmul.f32 %v178, -19.62
    %v180 = vmul.f32 %v110, %v112
    %v181 = vmul.f32 %v108, %v106
    %v182 = vadd.f32 %v180, %v181
    %v183 = vmul.f32 %v182, -19.62
    %v184 = vmul.f32 %v108, %v108
    %v185 = vmul.f32 %v110, %v110
    %v186 = vadd.f32 %v184, %v185
    %v187 = vmul.f32 %v186, 2.0
    %v188 = vsub.f32 1.0, %v187
    %v189 = vmul.f32 %v188, -9.81
    %v190 = vmul.f32 %v70, %v64
    %v191 = vmul.f32 %v73, %v61
    %v192 = vsub.f32 %v190, %v191
    %v193 = vmul.f32 %v73, %v58
    %v194 = vmul.f32 %v67, %v64
    %v195 = vsub.f32 %v193, %v194
    %v196 = vmul.f32 %v67, %v61
    %v197 = vmul.f32 %v70, %v58
    %v198 = vsub.f32 %v196, %v197
    %v199 = vsub.f32 %v179, %v192
    %v200 = vsub.f32 %v183, %v195
    %v201 = vadd.f32 %v85, %v189
    %v202 = vsub.f32 %v201, %v198
    %v203 = vmul.f32 %v67, 0.01566089
    %v204 = vmul.f32 %v70, 3.18037e-06
    %v205 = vadd.f32 %v203, %v204
    %v206 = vmul.f32 %v67, 3.18037e-06
    %v207 = vmul.f32 %v70, 0.01562078
    %v208 = vadd.f32 %v206, %v207
    %v209 = vmul.f32 %v73, 0.02226868
    %v210 = vmul.f32 %v70, %v209
    %v211 = vmul.f32 %v73, %v208
    %v212 = vsub.f32 %v210, %v211
    %v213 = vmul.f32 %v73, %v205
    %v214 = vmul.f32 %v67, %v209
    %v215 = vsub.f32 %v213, %v214
    %v216 = vmul.f32 %v67, %v208
    %v217 = vmul.f32 %v70, %v205
    %v218 = vsub.f32 %v216, %v217
    %v219 = vsub.f32 %v89, %v212
    %v220 = vsub.f32 %v94, %v215
    %v221 = vsub.f32 %v97, %v218
    %v222 = vmul.f32 %v219, 63.853336
    %v223 = vmul.f32 %v220, -0.013000454
    %v224 = vadd.f32 %v222, %v223
    %v225 = vmul.f32 %v219, -0.013000454
    %v226 = vmul.f32 %v220, 64.01729
    %v227 = vadd.f32 %v225, %v226
    %v228 = vmul.f32 %v221, 44.906116
    %v229 = vmul.f32 %v163, 0.025
    %v230 = vadd.f32 %v49, %v229
    %v231 = vmul.f32 %v169, 0.025
    %v232 = vadd.f32 %v52, %v231
    %v233 = vmul.f32 %v175, 0.025
    %v234 = vadd.f32 %v55, %v233
    %v235 = vmul.f32 %v199, 0.025
    %v236 = vadd.f32 %v58, %v235
    %v237 = vmul.f32 %v200, 0.025
    %v238 = vadd.f32 %v61, %v237
    %v239 = vmul.f32 %v202, 0.025
    %v240 = vadd.f32 %v64, %v239
    %v241 = vmul.f32 %v224, 0.025
    %v242 = vadd.f32 %v67, %v241
    %v243 = vmul.f32 %v227, 0.025
    %v244 = vadd.f32 %v70, %v243
    %v245 = vmul.f32 %v228, 0.025
    %v246 = vadd.f32 %v73, %v245
    %v247 = vmul.f32 %v230, %v230
    %v248 = vmul.f32 %v232, %v232
    %v249 = vadd.f32 %v247, %v248
    %v250 = vmul.f32 %v234, %v234
    %v251 = vadd.f32 %v249, %v250
    %v252 = vadd.f32 %v251, 1.0
    %v253 = vrcp.pop %v252
    %v254 = vsub.f32 1.0, %v251
    %v255 = vmul.f32 %v254, %v253
    %v256 = vmul.f32 %v230, 2.0
    %v257 = vmul.f32 %v256, %v253
    %v258 = vmul.f32 %v232, 2.0
    %v259 = vmul.f32 %v258, %v253
    %v260 = vmul.f32 %v234, 2.0
    %v261 = vmul.f32 %v260, %v253
    %v262 = vmul.f32 %v259, %v240
    %v263 = vmul.f32 %v261, %v238
    %v264 = vsub.f32 %v262, %v263
    %v265 = vmul.f32 %v261, %v236
    %v266 = vmul.f32 %v257, %v240
    %v267 = vsub.f32 %v265, %v266
    %v268 = vmul.f32 %v257, %v238
    %v269 = vmul.f32 %v259, %v236
    %v270 = vsub.f32 %v268, %v269
    %v271 = vmul.f32 %v255, %v236
    %v272 = vadd.f32 %v271, %v264
    %v273 = vmul.f32 %v255, %v238
    %v274 = vadd.f32 %v273, %v267
    %v275 = vmul.f32 %v255, %v240
    %v276 = vadd.f32 %v275, %v270
    %v277 = vmul.f32 %v259, %v276
    %v278 = vmul.f32 %v261, %v274
    %v279 = vsub.f32 %v277, %v278
    %v280 = vmul.f32 %v261, %v272
    %v281 = vmul.f32 %v257, %v276
    %v282 = vsub.f32 %v280, %v281
    %v283 = vmul.f32 %v257, %v274
    %v284 = vmul.f32 %v259, %v272
    %v285 = vsub.f32 %v283, %v284
    %v286 = vmul.f32 %v279, 2.0
    %v287 = vadd.f32 %v236, %v286
    %v288 = vmul.f32 %v282, 2.0
    %v289 = vadd.f32 %v238, %v288
    %v290 = vmul.f32 %v285, 2.0
    %v291 = vadd.f32 %v240, %v290
    %v292 = vmul.f32 %v230, %v242
    %v293 = vmul.f32 %v232, %v244
    %v294 = vadd.f32 %v292, %v293
    %v295 = vmul.f32 %v234, %v246
    %v296 = vadd.f32 %v294, %v295
    %v297 = vmul.f32 %v232, %v246
    %v298 = vmul.f32 %v234, %v244
    %v299 = vsub.f32 %v297, %v298
    %v300 = vmul.f32 %v234, %v242
    %v301 = vmul.f32 %v230, %v246
    %v302 = vsub.f32 %v300, %v301
    %v303 = vmul.f32 %v230, %v244
    %v304 = vmul.f32 %v232, %v242
    %v305 = vsub.f32 %v303, %v304
    %v306 = vmul.f32 %v254, %v242
    %v307 = vmul.f32 %v299, 2.0
    %v308 = vadd.f32 %v306, %v307
    %v309 = vmul.f32 %v296, 2.0
    %v310 = vmul.f32 %v309, %v230
    %v311 = vadd.f32 %v308, %v310
    %v312 = vmul.f32 %v311, 0.25
    %v313 = vmul.f32 %v254, %v244
    %v314 = vmul.f32 %v302, 2.0
    %v315 = vadd.f32 %v313, %v314
    %v316 = vmul.f32 %v309, %v232
    %v317 = vadd.f32 %v315, %v316
    %v318 = vmul.f32 %v317, 0.25
    %v319 = vmul.f32 %v254, %v246
    %v320 = vmul.f32 %v305, 2.0
    %v321 = vadd.f32 %v319, %v320
    %v322 = vmul.f32 %v309, %v234
    %v323 = vadd.f32 %v321, %v322
    %v324 = vmul.f32 %v323, 0.25
    %v325 = vmul.f32 %v257, %v261
    %v326 = vmul.f32 %v259, %v255
    %v327 = vsub.f32 %v325, %v326
    %v328 = vmul.f32 %v327, -19.62
    %v329 = vmul.f32 %v259, %v261
    %v330 = vmul.f32 %v257, %v255
    %v331 = vadd.f32 %v329, %v330
    %v332 = vmul.f32 %v331, -19.62
    %v333 = vmul.f32 %v257, %v257
    %v334 = vmul.f32 %v259, %v259
    %v335 = vadd.f32 %v333, %v334
    %v336 = vmul.f32 %v335, 2.0
    %v337 = vsub.f32 1.0, %v336
    %v338 = vmul.f32 %v337, -9.81
    %v339 = vmul.f32 %v244, %v240
    %v340 = vmul.f32 %v246, %v238
    %v341 = vsub.f32 %v339, %v340
    %v342 = vmul.f32 %v246, %v236
    %v343 = vmul.f32 %v242, %v240
    %v344 = vsub.f32 %v342, %v343
    %v345 = vmul.f32 %v242, %v238
    %v346 = vmul.f32 %v244, %v236
    %v347 = vsub.f32 %v345, %v346
    %v348 = vsub.f32 %v328, %v341
    %v349 = vsub.f32 %v332, %v344
    %v350 = vadd.f32 %v85, %v338
    %v351 = vsub.f32 %v350, %v347
    %v352 = vmul.f32 %v242, 0.01566089
    %v353 = vmul.f32 %v244, 3.18037e-06
    %v354 = vadd.f32 %v352, %v353
    %v355 = vmul.f32 %v242, 3.18037e-06
    %v356 = vmul.f32 %v244, 0.01562078
    %v357 = vadd.f32 %v355, %v356
    %v358 = vmul.f32 %v246, 0.02226868
    %v359 = vmul.f32 %v244, %v358
    %v360 = vmul.f32 %v246, %v357
    %v361 = vsub.f32 %v359, %v360
    %v362 = vmul.f32 %v246, %v354
    %v363 = vmul.f32 %v242, %v358
    %v364 = vsub.f32 %v362, %v363
    %v365 = vmul.f32 %v242, %v357
    %v366 = vmul.f32 %v244, %v354
    %v367 = vsub.f32 %v365, %v366
    %v368 = vsub.f32 %v89, %v361
    %v369 = vsub.f32 %v94, %v364
    %v370 = vsub.f32 %v97, %v367
    %v371 = vmul.f32 %v368, 63.853336
    %v372 = vmul.f32 %v369, -0.013000454
    %v373 = vadd.f32 %v371, %v372
    %v374 = vmul.f32 %v368, -0.013000454
    %v375 = vmul.f32 %v369, 64.01729
    %v376 = vadd.f32 %v374, %v375
    %v377 = vmul.f32 %v370, 44.906116
    %v378 = vmul.f32 %v287, 2.0
    %v379 = vadd.f32 %v138, %v378
    %v380 = vmul.f32 %v289, 2.0
    %v381 = vadd.f32 %v140, %v380
    %v382 = vmul.f32 %v291, 2.0
    %v383 = vadd.f32 %v142, %v382
    %v384 = vmul.f32 %v312, 2.0
    %v385 = vadd.f32 %v163, %v384
    %v386 = vmul.f32 %v318, 2.0
    %v387 = vadd.f32 %v169, %v386
    %v388 = vmul.f32 %v324, 2.0
    %v389 = vadd.f32 %v175, %v388
    %v390 = vmul.f32 %v348, 2.0
    %v391 = vadd.f32 %v199, %v390
    %v392 = vmul.f32 %v349, 2.0
    %v393 = vadd.f32 %v200, %v392
    %v394 = vmul.f32 %v351, 2.0
    %v395 = vadd.f32 %v202, %v394
    %v396 = vmul.f32 %v373, 2.0
    %v397 = vadd.f32 %v224, %v396
    %v398 = vmul.f32 %v376, 2.0
    %v399 = vadd.f32 %v227, %v398
    %v400 = vmul.f32 %v377, 2.0
    %v401 = vadd.f32 %v228, %v400
    %v402 = vmul.f32 %v312, 0.025
    %v403 = vadd.f32 %v49, %v402
    %v404 = vmul.f32 %v318, 0.025
    %v405 = vadd.f32 %v52, %v404
    %v406 = vmul.f32 %v324, 0.025
    %v407 = vadd.f32 %v55, %v406
    %v408 = vmul.f32 %v348, 0.025
    %v409 = vadd.f32 %v58, %v408
    %v410 = vmul.f32 %v349, 0.025
    %v411 = vadd.f32 %v61, %v410
    %v412 = vmul.f32 %v351, 0.025
    %v413 = vadd.f32 %v64, %v412
    %v414 = vmul.f32 %v373, 0.025
    %v415 = vadd.f32 %v67, %v414
    %v416 = vmul.f32 %v376, 0.025
    %v417 = vadd.f32 %v70, %v416
    %v418 = vmul.f32 %v377, 0.025
    %v419 = vadd.f32 %v73, %v418
    %v420 = vmul.f32 %v403, %v403
    %v421 = vmul.f32 %v405, %v405
    %v422 = vadd.f32 %v420, %v421
    %v423 = vmul.f32 %v407, %v407
    %v424 = vadd.f32 %v422, %v423
    %v425 = vadd.f32 %v424, 1.0
    %v426 = vrcp.pop %v425
    %v427 = vsub.f32 1.0, %v424
    %v428 = vmul.f32 %v427, %v426
    %v429 = vmul.f32 %v403, 2.0
    %v430 = vmul.f32 %v429, %v426
    %v431 = vmul.f32 %v405, 2.0
    %v432 = vmul.f32 %v431, %v426
    %v433 = vmul.f32 %v407, 2.0
    %v434 = vmul.f32 %v433, %v426
    %v435 = vmul.f32 %v432, %v413
    %v436 = vmul.f32 %v434, %v411
    %v437 = vsub.f32 %v435, %v436
    %v438 = vmul.f32 %v434, %v409
    %v439 = vmul.f32 %v430, %v413
    %v440 = vsub.f32 %v438, %v439
    %v441 = vmul.f32 %v430, %v411
    %v442 = vmul.f32 %v432, %v409
    %v443 = vsub.f32 %v441, %v442
    %v444 = vmul.f32 %v428, %v409
    %v445 = vadd.f32 %v444, %v437
    %v446 = vmul.f32 %v428, %v411
    %v447 = vadd.f32 %v446, %v440
    %v448 = vmul.f32 %v428, %v413
    %v449 = vadd.f32 %v448, %v443
    %v450 = vmul.f32 %v432, %v449
    %v451 = vmul.f32 %v434, %v447
    %v452 = vsub.f32 %v450, %v451
    %v453 = vmul.f32 %v434, %v445
    %v454 = vmul.f32 %v430, %v449
    %v455 = vsub.f32 %v453, %v454
    %v456 = vmul.f32 %v430, %v447
    %v457 = vmul.f32 %v432, %v445
    %v458 = vsub.f32 %v456, %v457
    %v459 = vmul.f32 %v452, 2.0
    %v460 = vadd.f32 %v409, %v459
    %v461 = vmul.f32 %v455, 2.0
    %v462 = vadd.f32 %v411, %v461
    %v463 = vmul.f32 %v458, 2.0
    %v464 = vadd.f32 %v413, %v463
    %v465 = vmul.f32 %v403, %v415
    %v466 = vmul.f32 %v405, %v417
    %v467 = vadd.f32 %v465, %v466
    %v468 = vmul.f32 %v407, %v419
    %v469 = vadd.f32 %v467, %v468
    %v470 = vmul.f32 %v405, %v419
    %v471 = vmul.f32 %v407, %v417
    %v472 = vsub.f32 %v470, %v471
    %v473 = vmul.f32 %v407, %v415
    %v474 = vmul.f32 %v403, %v419
    %v475 = vsub.f32 %v473, %v474
    %v476 = vmul.f32 %v403, %v417
    %v477 = vmul.f32 %v405, %v415
    %v478 = vsub.f32 %v476, %v477
    %v479 = vmul.f32 %v427, %v415
    %v480 = vmul.f32 %v472, 2.0
    %v481 = vadd.f32 %v479, %v480
    %v482 = vmul.f32 %v469, 2.0
    %v483 = vmul.f32 %v482, %v403
    %v484 = vadd.f32 %v481, %v483
    %v485 = vmul.f32 %v484, 0.25
    %v486 = vmul.f32 %v427, %v417
    %v487 = vmul.f32 %v475, 2.0
    %v488 = vadd.f32 %v486, %v487
    %v489 = vmul.f32 %v482, %v405
    %v490 = vadd.f32 %v488, %v489
    %v491 = vmul.f32 %v490, 0.25
    %v492 = vmul.f32 %v427, %v419
    %v493 = vmul.f32 %v478, 2.0
    %v494 = vadd.f32 %v492, %v493
    %v495 = vmul.f32 %v482, %v407
    %v496 = vadd.f32 %v494, %v495
    %v497 = vmul.f32 %v496, 0.25
    %v498 = vmul.f32 %v430, %v434
    %v499 = vmul.f32 %v432, %v428
    %v500 = vsub.f32 %v498, %v499
    %v501 = vmul.f32 %v500, -19.62
    %v502 = vmul.f32 %v432, %v434
    %v503 = vmul.f32 %v430, %v428
    %v504 = vadd.f32 %v502, %v503
    %v505 = vmul.f32 %v504, -19.62
    %v506 = vmul.f32 %v430, %v430
    %v507 = vmul.f32 %v432, %v432
    %v508 = vadd.f32 %v506, %v507
    %v509 = vmul.f32 %v508, 2.0
    %v510 = vsub.f32 1.0, %v509
    %v511 = vmul.f32 %v510, -9.81
    %v512 = vmul.f32 %v417, %v413
    %v513 = vmul.f32 %v419, %v411
    %v514 = vsub.f32 %v512, %v513
    %v515 = vmul.f32 %v419, %v409
    %v516 = vmul.f32 %v415, %v413
    %v517 = vsub.f32 %v515, %v516
    %v518 = vmul.f32 %v415, %v411
    %v519 = vmul.f32 %v417, %v409
    %v520 = vsub.f32 %v518, %v519
    %v521 = vsub.f32 %v501, %v514
    %v522 = vsub.f32 %v505, %v517
    %v523 = vadd.f32 %v85, %v511
    %v524 = vsub.f32 %v523, %v520
    %v525 = vmul.f32 %v415, 0.01566089
    %v526 = vmul.f32 %v417, 3.18037e-06
    %v527 = vadd.f32 %v525, %v526
    %v528 = vmul.f32 %v415, 3.18037e-06
    %v529 = vmul.f32 %v417, 0.01562078
    %v530 = vadd.f32 %v528, %v529
    %v531 = vmul.f32 %v419, 0.02226868
    %v532 = vmul.f32 %v417, %v531
    %v533 = vmul.f32 %v419, %v530
    %v534 = vsub.f32 %v532, %v533
    %v535 = vmul.f32 %v419, %v527
    %v536 = vmul.f32 %v415, %v531
    %v537 = vsub.f32 %v535, %v536
    %v538 = vmul.f32 %v415, %v530
    %v539 = vmul.f32 %v417, %v527
    %v540 = vsub.f32 %v538, %v539
    %v541 = vsub.f32 %v89, %v534
    %v542 = vsub.f32 %v94, %v537
    %v543 = vsub.f32 %v97, %v540
    %v544 = vmul.f32 %v541, 63.853336
    %v545 = vmul.f32 %v542, -0.013000454
    %v546 = vadd.f32 %v544, %v545
    %v547 = vmul.f32 %v541, -0.013000454
    %v548 = vmul.f32 %v542, 64.01729
    %v549 = vadd.f32 %v547, %v548
    %v550 = vmul.f32 %v543, 44.906116
    %v551 = vmul.f32 %v460, 2.0
    %v552 = vadd.f32 %v379, %v551
    %v553 = vmul.f32 %v462, 2.0
    %v554 = vadd.f32 %v381, %v553
    %v555 = vmul.f32 %v464, 2.0
    %v556 = vadd.f32 %v383, %v555
    %v557 = vmul.f32 %v485, 2.0
    %v558 = vadd.f32 %v385, %v557
    %v559 = vmul.f32 %v491, 2.0
    %v560 = vadd.f32 %v387, %v559
    %v561 = vmul.f32 %v497, 2.0
    %v562 = vadd.f32 %v389, %v561
    %v563 = vmul.f32 %v521, 2.0
    %v564 = vadd.f32 %v391, %v563
    %v565 = vmul.f32 %v522, 2.0
    %v566 = vadd.f32 %v393, %v565
    %v567 = vmul.f32 %v524, 2.0
    %v568 = vadd.f32 %v395, %v567
    %v569 = vmul.f32 %v546, 2.0
    %v570 = vadd.f32 %v397, %v569
    %v571 = vmul.f32 %v549, 2.0
    %v572 = vadd.f32 %v399, %v571
    %v573 = vmul.f32 %v550, 2.0
    %v574 = vadd.f32 %v401, %v573
    %v575 = vmul.f32 %v485, 0.05
    %v576 = vadd.f32 %v49, %v575
    %v577 = vmul.f32 %v491, 0.05
    %v578 = vadd.f32 %v52, %v577
    %v579 = vmul.f32 %v497, 0.05
    %v580 = vadd.f32 %v55, %v579
    %v581 = vmul.f32 %v521, 0.05
    %v582 = vadd.f32 %v58, %v581
    %v583 = vmul.f32 %v522, 0.05
    %v584 = vadd.f32 %v61, %v583
    %v585 = vmul.f32 %v524, 0.05
    %v586 = vadd.f32 %v64, %v585
    %v587 = vmul.f32 %v546, 0.05
    %v588 = vadd.f32 %v67, %v587
    %v589 = vmul.f32 %v549, 0.05
    %v590 = vadd.f32 %v70, %v589
    %v591 = vmul.f32 %v550, 0.05
    %v592 = vadd.f32 %v73, %v591
    %v593 = vmul.f32 %v576, %v576
    %v594 = vmul.f32 %v578, %v578
    %v595 = vadd.f32 %v593, %v594
    %v596 = vmul.f32 %v580, %v580
    %v597 = vadd.f32 %v595, %v596
    %v598 = vadd.f32 %v597, 1.0
    %v599 = vrcp.pop %v598
    %v600 = vsub.f32 1.0, %v597
    %v601 = vmul.f32 %v600, %v599
    %v602 = vmul.f32 %v576, 2.0
    %v603 = vmul.f32 %v602, %v599
    %v604 = vmul.f32 %v578, 2.0
    %v605 = vmul.f32 %v604, %v599
    %v606 = vmul.f32 %v580, 2.0
    %v607 = vmul.f32 %v606, %v599
    %v608 = vmul.f32 %v605, %v586
    %v609 = vmul.f32 %v607, %v584
    %v610 = vsub.f32 %v608, %v609
    %v611 = vmul.f32 %v607, %v582
    %v612 = vmul.f32 %v603, %v586
    %v613 = vsub.f32 %v611, %v612
    %v614 = vmul.f32 %v603, %v584
    %v615 = vmul.f32 %v605, %v582
    %v616 = vsub.f32 %v614, %v615
    %v617 = vmul.f32 %v601, %v582
    %v618 = vadd.f32 %v617, %v610
    %v619 = vmul.f32 %v601, %v584
    %v620 = vadd.f32 %v619, %v613
    %v621 = vmul.f32 %v601, %v586
    %v622 = vadd.f32 %v621, %v616
    %v623 = vmul.f32 %v605, %v622
    %v624 = vmul.f32 %v607, %v620
    %v625 = vsub.f32 %v623, %v624
    %v626 = vmul.f32 %v607, %v618
    %v627 = vmul.f32 %v603, %v622
    %v628 = vsub.f32 %v626, %v627
    %v629 = vmul.f32 %v603, %v620
    %v630 = vmul.f32 %v605, %v618
    %v631 = vsub.f32 %v629, %v630
    %v632 = vmul.f32 %v625, 2.0
    %v633 = vadd.f32 %v582, %v632
    %v634 = vmul.f32 %v628, 2.0
    %v635 = vadd.f32 %v584, %v634
    %v636 = vmul.f32 %v631, 2.0
    %v637 = vadd.f32 %v586, %v636
    %v638 = vmul.f32 %v576, %v588
    %v639 = vmul.f32 %v578, %v590
    %v640 = vadd.f32 %v638, %v639
    %v641 = vmul.f32 %v580, %v592
    %v642 = vadd.f32 %v640, %v641
    %v643 = vmul.f32 %v578, %v592
    %v644 = vmul.f32 %v580, %v590
    %v645 = vsub.f32 %v643, %v644
    %v646 = vmul.f32 %v580, %v588
    %v647 = vmul.f32 %v576, %v592
    %v648 = vsub.f32 %v646, %v647
    %v649 = vmul.f32 %v576, %v590
    %v650 = vmul.f32 %v578, %v588
    %v651 = vsub.f32 %v649, %v650
    %v652 = vmul.f32 %v600, %v588
    %v653 = vmul.f32 %v645, 2.0
    %v654 = vadd.f32 %v652, %v653
    %v655 = vmul.f32 %v642, 2.0
    %v656 = vmul.f32 %v655, %v576
    %v657 = vadd.f32 %v654, %v656
    %v658 = vmul.f32 %v657, 0.25
    %v659 = vmul.f32 %v600, %v590
    %v660 = vmul.f32 %v648, 2.0
    %v661 = vadd.f32 %v659, %v660
    %v662 = vmul.f32 %v655, %v578
    %v663 = vadd.f32 %v661, %v662
    %v664 = vmul.f32 %v663, 0.25
    %v665 = vmul.f32 %v600, %v592
    %v666 = vmul.f32 %v651, 2.0
    %v667 = vadd.f32 %v665, %v666
    %v668 = vmul.f32 %v655, %v580
    %v669 = vadd.f32 %v667, %v668
    %v670 = vmul.f32 %v669, 0.25
    %v671 = vmul.f32 %v603, %v607
    %v672 = vmul.f32 %v605, %v601
    %v673 = vsub.f32 %v671, %v672
    %v674 = vmul.f32 %v673, -19.62
    %v675 = vmul.f32 %v605, %v607
    %v676 = vmul.f32 %v603, %v601
    %v677 = vadd.f32 %v675, %v676
    %v678 = vmul.f32 %v677, -19.62
    %v679 = vmul.f32 %v603, %v603
    %v680 = vmul.f32 %v605, %v605
    %v681 = vadd.f32 %v679, %v680
    %v682 = vmul.f32 %v681, 2.0
    %v683 = vsub.f32 1.0, %v682
    %v684 = vmul.f32 %v683, -9.81
    %v685 = vmul.f32 %v590, %v586
    %v686 = vmul.f32 %v592, %v584
    %v687 = vsub.f32 %v685, %v686
    %v688 = vmul.f32 %v592, %v582
    %v689 = vmul.f32 %v588, %v586
    %v690 = vsub.f32 %v688, %v689
    %v691 = vmul.f32 %v588, %v584
    %v692 = vmul.f32 %v590, %v582
    %v693 = vsub.f32 %v691, %v692
    %v694 = vsub.f32 %v674, %v687
    %v695 = vsub.f32 %v678, %v690
    %v696 = vadd.f32 %v85, %v684
    %v697 = vsub.f32 %v696, %v693
    %v698 = vmul.f32 %v588, 0.01566089
    %v699 = vmul.f32 %v590, 3.18037e-06
    %v700 = vadd.f32 %v698, %v699
    %v701 = vmul.f32 %v588, 3.18037e-06
    %v702 = vmul.f32 %v590, 0.01562078
    %v703 = vadd.f32 %v701, %v702
    %v704 = vmul.f32 %v592, 0.02226868
    %v705 = vmul.f32 %v590, %v704
    %v706 = vmul.f32 %v592, %v703
    %v707 = vsub.f32 %v705, %v706
    %v708 = vmul.f32 %v592, %v700
    %v709 = vmul.f32 %v588, %v704
    %v710 = vsub.f32 %v708, %v709
    %v711 = vmul.f32 %v588, %v703
    %v712 = vmul.f32 %v590, %v700
    %v713 = vsub.f32 %v711, %v712
    %v714 = vsub.f32 %v89, %v707
    %v715 = vsub.f32 %v94, %v710
    %v716 = vsub.f32 %v97, %v713
    %v717 = vmul.f32 %v714, 63.853336
    %v718 = vmul.f32 %v715, -0.013000454
    %v719 = vadd.f32 %v717, %v718
    %v720 = vmul.f32 %v714, -0.013000454
    %v721 = vmul.f32 %v715, 64.01729
    %v722 = vadd.f32 %v720, %v721
    %v723 = vmul.f32 %v716, 44.906116
    %v724 = vadd.f32 %v552, %v633
    %v725 = vmul.f32 %v724, 0.008333334
    %v726 = vadd.f32 %v40, %v725
    %v727 = vadd.f32 %v554, %v635
    %v728 = vmul.f32 %v727, 0.008333334
    %v729 = vadd.f32 %v43, %v728
    %v730 = vadd.f32 %v556, %v637
    %v731 = vmul.f32 %v730, 0.008333334
    %v732 = vadd.f32 %v46, %v731
    %v733 = vadd.f32 %v558, %v658
    %v734 = vmul.f32 %v733, 0.008333334
    %v735 = vadd.f32 %v49, %v734
    %v736 = vadd.f32 %v560, %v664
    %v737 = vmul.f32 %v736, 0.008333334
    %v738 = vadd.f32 %v52, %v737
    %v739 = vadd.f32 %v562, %v670
    %v740 = vmul.f32 %v739, 0.008333334
    %v741 = vadd.f32 %v55, %v740
    %v742 = vadd.f32 %v564, %v694
    %v743 = vmul.f32 %v742, 0.008333334
    %v744 = vadd.f32 %v58, %v743
    %v745 = vadd.f32 %v566, %v695
    %v746 = vmul.f32 %v745, 0.008333334
    %v747 = vadd.f32 %v61, %v746
    %v748 = vadd.f32 %v568, %v697
    %v749 = vmul.f32 %v748, 0.008333334
    %v750 = vadd.f32 %v64, %v749
    %v751 = vadd.f32 %v570, %v719
    %v752 = vmul.f32 %v751, 0.008333334
    %v753 = vadd.f32 %v67, %v752
    %v754 = vadd.f32 %v572, %v722
    %v755 = vmul.f32 %v754, 0.008333334
    %v756 = vadd.f32 %v70, %v755
    %v757 = vadd.f32 %v574, %v723
    %v758 = vmul.f32 %v757, 0.008333334
    %v759 = vadd.f32 %v73, %v758
    %760 = vst [vmem:[#allocation7] sm:$0xff] %v726
    %s761 = scalar_lea.vmem [#allocation7], %s41
    %762 = vst [vmem:[%s761] sm:$0xff] %v729
    %s763 = scalar_lea.vmem [#allocation7], %s44
    %764 = vst [vmem:[%s763] sm:$0xff] %v732
    %s765 = scalar_lea.vmem [#allocation7], %s47
    %766 = vst [vmem:[%s765] sm:$0xff] %v735
    %s767 = scalar_lea.vmem [#allocation7], %s50
    %768 = vst [vmem:[%s767] sm:$0xff] %v738
    %s769 = scalar_lea.vmem [#allocation7], %s53
    %770 = vst [vmem:[%s769] sm:$0xff] %v741
    %s771 = scalar_lea.vmem [#allocation7], %s56
    %772 = vst [vmem:[%s771] sm:$0xff] %v744
    %s773 = scalar_lea.vmem [#allocation7], %s59
    %774 = vst [vmem:[%s773] sm:$0xff] %v747
    %s775 = scalar_lea.vmem [#allocation7], %s62
    %776 = vst [vmem:[%s775] sm:$0xff] %v750
    %s777 = scalar_lea.vmem [#allocation7], %s65
    %778 = vst [vmem:[%s777] sm:$0xff] %v753
    %s779 = scalar_lea.vmem [#allocation7], %s68
    %780 = vst [vmem:[%s779] sm:$0xff] %v756
    %s781 = scalar_lea.vmem [#allocation7], %s71
    %782 = vst [vmem:[%s781] sm:$0xff] %v759
    // Predicated region
    $region18: #{tpu_custom_call.1} parent=1 // pred_check
      _
    $region19: #{tpu_custom_call.1} parent=1 // pred_check_branch
      %784 = sbr.rel (0) target = $region21
    $region20: #{tpu_custom_call.1} parent=1 // pred_region
      %s786 = ssub.s32 1536, 1536
      %787 = vsyncadd [#allocation4], %s786
      %s788 = sshll.u32 [#allocation7], 4
      %s789 = int_to_ptr.vmem [resolvable:$true] %s788
      %794 = dma.vmem_to_hbm [thread:$0]  %s789, 1536, %s2, [#allocation4], 128, 128, 8
    $region21: #{tpu_custom_call.1} parent=1 // pred_fallthru
      _
    // Predicated region
    $region22: #{tpu_custom_call.1} parent=1 // pred_check
      _
    $region23: #{tpu_custom_call.1} parent=1 // pred_check_branch
      %796 = sbr.rel (0) target = $region25
    $region24: #{tpu_custom_call.1} parent=1 // pred_region
      %797 = dma.done [#allocation4], 1536
    $region25: #{tpu_custom_call.1} parent=1 // pred_fallthru
      _
    %798 = vsyncpa [#allocation3], 1
    %799 = vsyncpa [#allocation6], 1
    %800 = vsyncpa [#allocation4], 1

</llo_original>
